<compile_context>
chip_gen: v7x
topology: tpu7x:2x2x1
jax: 0.10.0
libtpu: 0.0.40
codegen_flags: <defaults>
</compile_context>

<pallas_src>
from functools import partial

import jax
import jax.numpy as jnp
from jax import lax
from jax.experimental import pallas as pl
from jax.experimental.pallas import tpu as pltpu


# ----------------------------------------------------------------------------
# Parameter preparation (BN folding + banded conv weights)
# ----------------------------------------------------------------------------

def _fold_bn(w_oihw, conv_b, gamma, beta, run_mean, run_var, eps):
    """Fold inference BatchNorm into the conv weights / bias."""
    scale = gamma / jnp.sqrt(run_var + eps)                       # (C,)
    w = w_oihw.astype(jnp.float32) * scale[:, None, None, None]   # out-channel
    bias = beta + scale * (conv_b - run_mean)                     # (C,)
    return w, bias.astype(jnp.float32)


def _banded_weights(w_f, W, C):
    """B[ky, j*C+ci, wo*C+co] = w[co, ci, ky, j-wo+1] when |j-wo| <= 1 else 0.

    The conv's left/right zero-padding columns contribute nothing, so they are
    dropped from the band: K = W*C (lane aligned), activations need no column
    padding.  Row (ky) padding is handled by a 2-row zero ring in the kernel.
    """
    wk = jnp.transpose(w_f, (2, 3, 1, 0))                 # (ky, kx, ci, co)
    j = jnp.arange(W)[:, None]
    wo = jnp.arange(W)[None, :]
    kx = j - wo + 1                                       # (W, W)
    valid = ((kx >= 0) & (kx <= 2)).astype(wk.dtype)
    b5 = wk[:, jnp.clip(kx, 0, 2), :, :] * valid[None, :, :, None, None]
    # (ky, j, wo, ci, co) -> (ky, j, ci, wo, co) -> (3, W*C, W*C)
    return jnp.transpose(b5, (0, 1, 3, 2, 4)).reshape(3, W * C, W * C)


# ----------------------------------------------------------------------------
# VMEM budgeting / tile selection
# ----------------------------------------------------------------------------

def _vmem_limit_bytes():
    try:
        cap = int(pltpu.get_tpu_info().vmem_capacity_bytes)
    except Exception:                       # off-TPU tracing / older runtimes
        cap = 64 * 1024 * 1024              # conservative (v7x physical VMEM)
    return (3 * cap) // 4                   # leave headroom for the compiler


def _estimate_vmem_bytes(tile_h, halo, WC, x_bytes, c_bytes, tiled):
    ext = tile_h + (2 * halo if tiled else 0)
    wt = 2 * 3 * WC * WC * c_bytes          # weights (assume 2 buffers, safe)
    bias = 2 * WC * 4
    xblk = 2 * tile_h * WC * x_bytes        # double-buffered x block
    oblk = 2 * tile_h * WC * 4              # double-buffered out block
    hblk = (4 * (((halo + 7) // 8) * 8) * WC * x_bytes) if tiled else 0
    pad = (ext + 2) * WC * c_bytes          # zero-ring scratch
    live = 4 * ext * WC * 4                 # x_ext / r / acc temporaries (f32)
    return wt + bias + xblk + oblk + hblk + pad + live


def _choose_tile_h(H, WC, halo, x_bytes, c_bytes, budget):
    if _estimate_vmem_bytes(H, halo, WC, x_bytes, c_bytes, False) <= budget:
        return H                            # whole image per batch: best case
    divs = [d for d in range(H - 1, 7, -1) if H % d == 0 and d % 8 == 0]
    for d in divs:
        if _estimate_vmem_bytes(d, halo, WC, x_bytes, c_bytes, True) <= budget:
            return d
    # TODO(synk): heights with no 8-divisible divisor that fits VMEM would need
    # an extra W/C tiling level; fall back to the smallest valid divisor.
    return divs[-1] if divs else H


def _const_spec(block_shape, single_buffer):
    """BlockSpec for a grid-invariant (constant) operand."""
    zero = (0,) * len(block_shape)
    index_map = lambda *_: zero
    if single_buffer:
        try:
            # Constant block index -> one VMEM buffer is enough.
            return pl.BlockSpec(block_shape, index_map,
                                pipeline_mode=pl.Buffered(1))
        except Exception:                   # signature mismatch: fall back
            pass
    return pl.BlockSpec(block_shape, index_map)


# ----------------------------------------------------------------------------
# Kernels
# ----------------------------------------------------------------------------

def _conv_bn_relu(pad_ref, w_ref, bias_b, v, rows):
    """Folded conv+BN+ReLU over `rows` rows resident in VMEM.

    pad_ref: (rows+2, W*C) scratch; rows 0 and rows+1 hold the zero ring.
    v      : (rows, W*C) f32 conv input.  Returns (rows, W*C) f32.
    """
    pad_ref[1:rows + 1, :] = v.astype(pad_ref.dtype)
    acc = jnp.dot(pad_ref[0:rows, :], w_ref[0],
                  preferred_element_type=jnp.float32)
    acc = acc + jnp.dot(pad_ref[1:rows + 1, :], w_ref[1],
                        preferred_element_type=jnp.float32)
    acc = acc + jnp.dot(pad_ref[2:rows + 2, :], w_ref[2],
                        preferred_element_type=jnp.float32)
    return jnp.maximum(acc + bias_b, 0.0)


def _rc_full_kernel(x_ref, w_ref, b_ref, out_ref, pad_ref, *, t, H, WC):
    """Whole image of one batch element resident in VMEM (no halo, no masks)."""
    zrow = jnp.zeros((1, WC), pad_ref.dtype)
    pad_ref[0:1, :] = zrow                          # zero ring only (2 rows)
    pad_ref[H + 1:H + 2, :] = zrow

    bias_b = jnp.broadcast_to(b_ref[...].astype(jnp.float32), (H, WC))
    x = x_ref[0].astype(jnp.float32)

    r = _conv_bn_relu(pad_ref, w_ref, bias_b, x, H)
    for _ in range(t):                              # static t -> unrolled
        r = _conv_bn_relu(pad_ref, w_ref, bias_b, x + r, H)
    out_ref[0, :, :] = r.astype(out_ref.dtype)


def _rc_tiled_kernel(xc_ref, xt_ref, xb_ref, w_ref, b_ref, out_ref, pad_ref,
                     *, t, tile_h, H, WC, halo_pad):
    """Row-tiled path: recompute the recurrence locally with a (t+1)-row halo.

    Halo rows are fetched as small neighbour slabs (halo_pad rows, zero outside
    the image), so no input masking and no full-neighbour-tile DMA is needed.
    """
    halo = t + 1
    ext = tile_h + 2 * halo
    h = pl.program_id(1)

    top = xt_ref[0, 0, halo_pad - halo:, :]
    bot = xb_ref[0, 0, :halo, :]
    x_ext = jnp.concatenate([top, xc_ref[0], bot], axis=0).astype(jnp.float32)

    # Recurrent state at out-of-image halo rows must stay exactly zero (it is
    # the conv zero padding for the next iteration); only edge tiles have any.
    row = lax.broadcasted_iota(jnp.int32, (ext, 1), 0)
    img_row = h * tile_h + row - halo
    r_mask = ((img_row >= 0) & (img_row < H)).astype(jnp.float32)

    zrow = jnp.zeros((1, WC), pad_ref.dtype)
    pad_ref[0:1, :] = zrow
    pad_ref[ext + 1:ext + 2, :] = zrow

    bias_b = jnp.broadcast_to(b_ref[...].astype(jnp.float32), (ext, WC))

    r = _conv_bn_relu(pad_ref, w_ref, bias_b, x_ext, ext) * r_mask
    for _ in range(t):
        r = _conv_bn_relu(pad_ref, w_ref, bias_b, x_ext + r, ext) * r_mask
    out_ref[0, :, :] = r[halo:halo + tile_h, :].astype(out_ref.dtype)


# ----------------------------------------------------------------------------
# Wrappers
# ----------------------------------------------------------------------------

def rc_block_nhwc(x_nhwc, w_oihw, conv_b, gamma, beta, run_mean, run_var, *,
                  t=2, eps=1e-5, tile_h=None, compute_dtype=jnp.bfloat16,
                  single_buffer_consts=True):
    """NHWC in / NHWC out."""
    N, H, W, C = x_nhwc.shape
    WC = W * C
    halo = t + 1
    x_bytes = jnp.dtype(x_nhwc.dtype).itemsize
    c_bytes = jnp.dtype(compute_dtype).itemsize

    vmem_limit = _vmem_limit_bytes()
    if tile_h is None:
        tile_h = _choose_tile_h(H, WC, halo, x_bytes, c_bytes, vmem_limit)
    if tile_h != H and (H % tile_h != 0 or tile_h % 8 != 0):
        raise ValueError("tile_h must divide H and be a multiple of 8, or == H")

    w_f, bias_c = _fold_bn(w_oihw, conv_b, gamma, beta, run_mean, run_var, eps)
    w_banded = _banded_weights(w_f, W, C).astype(compute_dtype)   # (3, WC, WC)
    bias_flat = jnp.tile(bias_c, W).reshape(1, WC)                # (1, WC) f32

    x_flat = x_nhwc.reshape(N, H, WC)       # native dtype; cast inside kernel

    w_spec = _const_spec((3, WC, WC), single_buffer_consts)
    b_spec = _const_spec((1, WC), single_buffer_consts)

    if tile_h == H:
        kern = partial(_rc_full_kernel, t=t, H=H, WC=WC)
        out = pl.pallas_call(
            kern,
            out_shape=jax.ShapeDtypeStruct((N, H, WC), jnp.float32),
            grid_spec=pltpu.PrefetchScalarGridSpec(
                num_scalar_prefetch=0,
                grid=(N,),
                in_specs=[pl.BlockSpec((1, H, WC), lambda n: (n, 0, 0)),
                          w_spec, b_spec],
                out_specs=pl.BlockSpec((1, H, WC), lambda n: (n, 0, 0)),
                scratch_shapes=[pltpu.VMEM((H + 2, WC), compute_dtype)]),
            compiler_params=pltpu.CompilerParams(
                dimension_semantics=("parallel",),
                vmem_limit_bytes=vmem_limit),
        )(x_flat, w_banded, bias_flat)
    else:
        nh = H // tile_h
        halo_pad = max(8, ((halo + 7) // 8) * 8)
        ext = tile_h + 2 * halo

        # Halo-only neighbour slabs (zeros outside the image == conv padding).
        xp = jnp.pad(x_flat, ((0, 0), (halo_pad, halo_pad), (0, 0)))
        top = jnp.stack(
            [xp[:, hb * tile_h: hb * tile_h + halo_pad, :] for hb in range(nh)],
            axis=1)                                       # (N, nh, halo_pad, WC)
        bot = jnp.stack(
            [xp[:, halo_pad + (hb + 1) * tile_h:
                   halo_pad + (hb + 1) * tile_h + halo_pad, :]
             for hb in range(nh)], axis=1)

        kern = partial(_rc_tiled_kernel, t=t, tile_h=tile_h, H=H, WC=WC,
                       halo_pad=halo_pad)
        out = pl.pallas_call(
            kern,
            out_shape=jax.ShapeDtypeStruct((N, H, WC), jnp.float32),
            grid_spec=pltpu.PrefetchScalarGridSpec(
                num_scalar_prefetch=0,
                grid=(N, nh),
                in_specs=[
                    pl.BlockSpec((1, tile_h, WC), lambda n, h: (n, h, 0)),
                    pl.BlockSpec((1, 1, halo_pad, WC), lambda n, h: (n, h, 0, 0)),
                    pl.BlockSpec((1, 1, halo_pad, WC), lambda n, h: (n, h, 0, 0)),
                    w_spec, b_spec],
                out_specs=pl.BlockSpec((1, tile_h, WC), lambda n, h: (n, h, 0)),
                scratch_shapes=[pltpu.VMEM((ext + 2, WC), compute_dtype)]),
            compiler_params=pltpu.CompilerParams(
                dimension_semantics=("parallel", "parallel"),
                vmem_limit_bytes=vmem_limit),
        )(x_flat, top, bot, w_banded, bias_flat)

    return out.reshape(N, H, W, C)


@partial(jax.jit, static_argnames=("t", "eps", "tile_h", "compute_dtype",
                                   "single_buffer_consts"))
def rc_block(x_nchw, w_oihw, conv_b, gamma, beta, run_mean, run_var, *,
             t=2, eps=1e-5, tile_h=None, compute_dtype=jnp.bfloat16,
             single_buffer_consts=True):
    """PyTorch-compatible wrapper: NCHW in, NCHW out (jitted; prep is cached)."""
    x_nhwc = jnp.transpose(x_nchw, (0, 2, 3, 1))
    out = rc_block_nhwc(x_nhwc, w_oihw, conv_b, gamma, beta, run_mean, run_var,
                        t=t, eps=eps, tile_h=tile_h,
                        compute_dtype=compute_dtype,
                        single_buffer_consts=single_buffer_consts)
    return jnp.transpose(out, (0, 3, 1, 2))


def rc_block_reference(x, w_oihw, conv_b, gamma, beta, mean, var,
                       *, t=2, eps=1e-5):
    """Pure-JAX reference (NCHW), mirrors the PyTorch forward."""
    def conv_bn_relu(inp):
        y = lax.conv_general_dilated(
            inp, w_oihw, window_strides=(1, 1), padding=((1, 1), (1, 1)),
            dimension_numbers=('NCHW', 'OIHW', 'NCHW'),
            precision=lax.Precision.HIGHEST)
        y = y + conv_b[None, :, None, None]
        y = (y - mean[None, :, None, None]) / jnp.sqrt(
            var[None, :, None, None] + eps)
        y = y * gamma[None, :, None, None] + beta[None, :, None, None]
        return jnp.maximum(y, 0.0)

    r = conv_bn_relu(x)
    for _ in range(t):
        r = conv_bn_relu(x + r)
    return r


if __name__ == "__main__":
    key = jax.random.PRNGKey(0)
    k_x, k_w, k_b, k_g, k_be, k_m, k_v, k_x2 = jax.random.split(key, 8)

    N, C, H, W = 2, 8, 16, 16          # W*C = 128 -> lane-dense working layout
    t = 2

    x = jax.random.normal(k_x, (N, C, H, W), jnp.float32)

    # deterministic synthetic parameters (shapes from nn.Conv2d / nn.BatchNorm2d)
    fan_in = C * 3 * 3
    bound = 1.0 / (fan_in ** 0.5)
    w_oihw = jax.random.uniform(k_w, (C, C, 3, 3), jnp.float32, -bound, bound)
    conv_b = jax.random.uniform(k_b, (C,), jnp.float32, -bound, bound)
    gamma = 1.0 + 0.1 * jax.random.normal(k_g, (C,), jnp.float32)
    beta = 0.1 * jax.random.normal(k_be, (C,), jnp.float32)
    run_mean = 0.1 * jax.random.normal(k_m, (C,), jnp.float32)
    run_var = jax.random.uniform(k_v, (C,), jnp.float32, 0.5, 1.5)

    def run(x_in, **kw):
        # Prefer single-buffered constants; fall back to default buffering if
        # this JAX build rejects pipeline_mode=pl.Buffered(1) at lowering time.
        try:
            return jax.block_until_ready(
                rc_block(x_in, w_oihw, conv_b, gamma, beta, run_mean, run_var,
                         t=t, single_buffer_consts=True, **kw))
        except Exception:
            return jax.block_until_ready(
                rc_block(x_in, w_oihw, conv_b, gamma, beta, run_mean, run_var,
                         t=t, single_buffer_consts=False, **kw))

    ref = jax.block_until_ready(
        rc_block_reference(x, w_oihw, conv_b, gamma, beta, run_mean, run_var, t=t))

    # f32 MXU operands (full-image-in-VMEM path): must match tightly.
    out = run(x, compute_dtype=jnp.float32)
    assert out.shape == (N, C, H, W)
    assert jnp.allclose(out, ref, rtol=1e-3, atol=1e-3), (
        float(jnp.max(jnp.abs(out - ref))))

    # bf16 MXU operands, f32 accumulation: looser check (rounding compounds
    # over the t+1 convs of the recurrence).
    out_bf16 = run(x, compute_dtype=jnp.bfloat16)
    assert jnp.allclose(out_bf16, ref, rtol=5e-2, atol=5e-2), (
        float(jnp.max(jnp.abs(out_bf16 - ref))))

    # Exercise the row-tiled (halo) path too: taller image, explicit tile_h.
    H2 = 32
    x2 = jax.random.normal(k_x2, (1, C, H2, W), jnp.float32)
    ref2 = jax.block_until_ready(
        rc_block_reference(x2, w_oihw, conv_b, gamma, beta, run_mean, run_var, t=t))
    out2 = run(x2, tile_h=16, compute_dtype=jnp.float32)
    assert jnp.allclose(out2, ref2, rtol=1e-3, atol=1e-3), (
        float(jnp.max(jnp.abs(out2 - ref2))))

    print("KERNEL_OK")
</pallas_src>

<mosaic_0001>
module attributes {stable_mosaic.version = 11 : i64} {
  func.func @_rc_full_kernel(%arg0: i32, %arg1: memref<1x16x128xf32, #tpu.memory_space<vmem>>, %arg2: memref<3x128x128xf32, #tpu.memory_space<vmem>>, %arg3: memref<1x128xf32, #tpu.memory_space<vmem>>, %arg4: memref<1x16x128xf32, #tpu.memory_space<vmem>>, %arg5: memref<18x128xf32, #tpu.memory_space<vmem>>) attributes {dimension_semantics = [#tpu.dimension_semantics<parallel>], iteration_bounds = array<i64: 2>, scalar_prefetch = 0 : i64, scratch_operands = 1 : i64, tpu.core_type = #tpu.core_type<tc>, window_params = [{transform_indices = @transform_0, window_bounds = array<i64: 1, 16, 128>}, {pipeline_mode = #tpu.pipeline_mode<synchronous>, transform_indices = @transform_1, window_bounds = array<i64: 3, 128, 128>}, {pipeline_mode = #tpu.pipeline_mode<synchronous>, transform_indices = @transform_2, window_bounds = array<i64: 1, 128>}, {transform_indices = @transform_3, window_bounds = array<i64: 1, 16, 128>}]} {
    %cst = arith.constant 0.000000e+00 : f32
    %0 = vector.broadcast %cst : f32 to vector<1x128xf32>
    %c0 = arith.constant 0 : index
    %c0_0 = arith.constant 0 : index
    %1 = vector.load %arg5[%c0, %c0_0] : memref<18x128xf32, #tpu.memory_space<vmem>>, vector<1x128xf32>
    tpu.vector_store %arg5[%c0, %c0_0], %0 {strides = array<i32>} : memref<18x128xf32, #tpu.memory_space<vmem>>, vector<1x128xf32>,
    %c17 = arith.constant 17 : index
    %c0_1 = arith.constant 0 : index
    %2 = vector.load %arg5[%c17, %c0_1] : memref<18x128xf32, #tpu.memory_space<vmem>>, vector<1x128xf32>
    tpu.vector_store %arg5[%c17, %c0_1], %0 {strides = array<i32>} : memref<18x128xf32, #tpu.memory_space<vmem>>, vector<1x128xf32>,
    %c0_2 = arith.constant 0 : index
    %c0_3 = arith.constant 0 : index
    %3 = vector.load %arg3[%c0_2, %c0_3] : memref<1x128xf32, #tpu.memory_space<vmem>>, vector<1x128xf32>
    %4 = vector.shape_cast %3 : vector<1x128xf32> to vector<1x128xf32>
    %5 = vector.broadcast %4 : vector<1x128xf32> to vector<16x128xf32>
    %c0_4 = arith.constant 0 : index
    %c0_5 = arith.constant 0 : index
    %c0_6 = arith.constant 0 : index
    %6 = vector.load %arg1[%c0_4, %c0_5, %c0_6] : memref<1x16x128xf32, #tpu.memory_space<vmem>>, vector<1x16x128xf32>
    %7 = vector.shape_cast %6 : vector<1x16x128xf32> to vector<16x128xf32>
    %c1 = arith.constant 1 : index
    %c0_7 = arith.constant 0 : index
    %8 = vector.load %arg5[%c1, %c0_7] : memref<18x128xf32, #tpu.memory_space<vmem>>, vector<16x128xf32>
    tpu.vector_store %arg5[%c1, %c0_7], %7 {strides = array<i32>} : memref<18x128xf32, #tpu.memory_space<vmem>>, vector<16x128xf32>,
    %c0_8 = arith.constant 0 : index
    %c0_9 = arith.constant 0 : index
    %9 = vector.load %arg5[%c0_8, %c0_9] : memref<18x128xf32, #tpu.memory_space<vmem>>, vector<16x128xf32>
    %c0_10 = arith.constant 0 : index
    %c0_11 = arith.constant 0 : index
    %c0_12 = arith.constant 0 : index
    %10 = vector.load %arg2[%c0_10, %c0_11, %c0_12] : memref<3x128x128xf32, #tpu.memory_space<vmem>>, vector<1x128x128xf32>
    %11 = vector.shape_cast %10 : vector<1x128x128xf32> to vector<128x128xf32>
    %cst_13 = arith.constant dense<0.000000e+00> : vector<16x128xf32>
    %12 = tpu.matmul %9, %11, %cst_13 {dimension_numbers = #tpu.dot_dimension_numbers<[1], [0], [0], [1], [0, 0, 1, 1], [], []>} : vector<16x128xf32>, vector<128x128xf32>, vector<16x128xf32> -> vector<16x128xf32>
    %c1_14 = arith.constant 1 : index
    %c0_15 = arith.constant 0 : index
    %13 = vector.load %arg5[%c1_14, %c0_15] : memref<18x128xf32, #tpu.memory_space<vmem>>, vector<16x128xf32>
    %c1_16 = arith.constant 1 : index
    %c0_17 = arith.constant 0 : index
    %c0_18 = arith.constant 0 : index
    %14 = vector.load %arg2[%c1_16, %c0_17, %c0_18] : memref<3x128x128xf32, #tpu.memory_space<vmem>>, vector<1x128x128xf32>
    %15 = vector.shape_cast %14 : vector<1x128x128xf32> to vector<128x128xf32>
    %cst_19 = arith.constant dense<0.000000e+00> : vector<16x128xf32>
    %16 = tpu.matmul %13, %15, %cst_19 {dimension_numbers = #tpu.dot_dimension_numbers<[1], [0], [0], [1], [0, 0, 1, 1], [], []>} : vector<16x128xf32>, vector<128x128xf32>, vector<16x128xf32> -> vector<16x128xf32>
    %17 = arith.addf %12, %16 : vector<16x128xf32>
    %c2 = arith.constant 2 : index
    %c0_20 = arith.constant 0 : index
    %18 = vector.load %arg5[%c2, %c0_20] : memref<18x128xf32, #tpu.memory_space<vmem>>, vector<16x128xf32>
    %c2_21 = arith.constant 2 : index
    %c0_22 = arith.constant 0 : index
    %c0_23 = arith.constant 0 : index
    %19 = vector.load %arg2[%c2_21, %c0_22, %c0_23] : memref<3x128x128xf32, #tpu.memory_space<vmem>>, vector<1x128x128xf32>
    %20 = vector.shape_cast %19 : vector<1x128x128xf32> to vector<128x128xf32>
    %cst_24 = arith.constant dense<0.000000e+00> : vector<16x128xf32>
    %21 = tpu.matmul %18, %20, %cst_24 {dimension_numbers = #tpu.dot_dimension_numbers<[1], [0], [0], [1], [0, 0, 1, 1], [], []>} : vector<16x128xf32>, vector<128x128xf32>, vector<16x128xf32> -> vector<16x128xf32>
    %22 = arith.addf %17, %21 : vector<16x128xf32>
    %23 = arith.addf %22, %5 : vector<16x128xf32>
    %cst_25 = arith.constant 0.000000e+00 : f32
    %24 = vector.broadcast %cst_25 : f32 to vector<16x128xf32>
    %25 = arith.maximumf %23, %24 : vector<16x128xf32>
    %26 = arith.addf %7, %25 : vector<16x128xf32>
    %c1_26 = arith.constant 1 : index
    %c0_27 = arith.constant 0 : index
    %27 = vector.load %arg5[%c1_26, %c0_27] : memref<18x128xf32, #tpu.memory_space<vmem>>, vector<16x128xf32>
    tpu.vector_store %arg5[%c1_26, %c0_27], %26 {strides = array<i32>} : memref<18x128xf32, #tpu.memory_space<vmem>>, vector<16x128xf32>,
    %c0_28 = arith.constant 0 : index
    %c0_29 = arith.constant 0 : index
    %28 = vector.load %arg5[%c0_28, %c0_29] : memref<18x128xf32, #tpu.memory_space<vmem>>, vector<16x128xf32>
    %c0_30 = arith.constant 0 : index
    %c0_31 = arith.constant 0 : index
    %c0_32 = arith.constant 0 : index
    %29 = vector.load %arg2[%c0_30, %c0_31, %c0_32] : memref<3x128x128xf32, #tpu.memory_space<vmem>>, vector<1x128x128xf32>
    %30 = vector.shape_cast %29 : vector<1x128x128xf32> to vector<128x128xf32>
    %cst_33 = arith.constant dense<0.000000e+00> : vector<16x128xf32>
    %31 = tpu.matmul %28, %30, %cst_33 {dimension_numbers = #tpu.dot_dimension_numbers<[1], [0], [0], [1], [0, 0, 1, 1], [], []>} : vector<16x128xf32>, vector<128x128xf32>, vector<16x128xf32> -> vector<16x128xf32>
    %c1_34 = arith.constant 1 : index
    %c0_35 = arith.constant 0 : index
    %32 = vector.load %arg5[%c1_34, %c0_35] : memref<18x128xf32, #tpu.memory_space<vmem>>, vector<16x128xf32>
    %c1_36 = arith.constant 1 : index
    %c0_37 = arith.constant 0 : index
    %c0_38 = arith.constant 0 : index
    %33 = vector.load %arg2[%c1_36, %c0_37, %c0_38] : memref<3x128x128xf32, #tpu.memory_space<vmem>>, vector<1x128x128xf32>
    %34 = vector.shape_cast %33 : vector<1x128x128xf32> to vector<128x128xf32>
    %cst_39 = arith.constant dense<0.000000e+00> : vector<16x128xf32>
    %35 = tpu.matmul %32, %34, %cst_39 {dimension_numbers = #tpu.dot_dimension_numbers<[1], [0], [0], [1], [0, 0, 1, 1], [], []>} : vector<16x128xf32>, vector<128x128xf32>, vector<16x128xf32> -> vector<16x128xf32>
    %36 = arith.addf %31, %35 : vector<16x128xf32>
    %c2_40 = arith.constant 2 : index
    %c0_41 = arith.constant 0 : index
    %37 = vector.load %arg5[%c2_40, %c0_41] : memref<18x128xf32, #tpu.memory_space<vmem>>, vector<16x128xf32>
    %c2_42 = arith.constant 2 : index
    %c0_43 = arith.constant 0 : index
    %c0_44 = arith.constant 0 : index
    %38 = vector.load %arg2[%c2_42, %c0_43, %c0_44] : memref<3x128x128xf32, #tpu.memory_space<vmem>>, vector<1x128x128xf32>
    %39 = vector.shape_cast %38 : vector<1x128x128xf32> to vector<128x128xf32>
    %cst_45 = arith.constant dense<0.000000e+00> : vector<16x128xf32>
    %40 = tpu.matmul %37, %39, %cst_45 {dimension_numbers = #tpu.dot_dimension_numbers<[1], [0], [0], [1], [0, 0, 1, 1], [], []>} : vector<16x128xf32>, vector<128x128xf32>, vector<16x128xf32> -> vector<16x128xf32>
    %41 = arith.addf %36, %40 : vector<16x128xf32>
    %42 = arith.addf %41, %5 : vector<16x128xf32>
    %cst_46 = arith.constant 0.000000e+00 : f32
    %43 = vector.broadcast %cst_46 : f32 to vector<16x128xf32>
    %44 = arith.maximumf %42, %43 : vector<16x128xf32>
    %45 = arith.addf %7, %44 : vector<16x128xf32>
    %c1_47 = arith.constant 1 : index
    %c0_48 = arith.constant 0 : index
    %46 = vector.load %arg5[%c1_47, %c0_48] : memref<18x128xf32, #tpu.memory_space<vmem>>, vector<16x128xf32>
    tpu.vector_store %arg5[%c1_47, %c0_48], %45 {strides = array<i32>} : memref<18x128xf32, #tpu.memory_space<vmem>>, vector<16x128xf32>,
    %c0_49 = arith.constant 0 : index
    %c0_50 = arith.constant 0 : index
    %47 = vector.load %arg5[%c0_49, %c0_50] : memref<18x128xf32, #tpu.memory_space<vmem>>, vector<16x128xf32>
    %c0_51 = arith.constant 0 : index
    %c0_52 = arith.constant 0 : index
    %c0_53 = arith.constant 0 : index
    %48 = vector.load %arg2[%c0_51, %c0_52, %c0_53] : memref<3x128x128xf32, #tpu.memory_space<vmem>>, vector<1x128x128xf32>
    %49 = vector.shape_cast %48 : vector<1x128x128xf32> to vector<128x128xf32>
    %cst_54 = arith.constant dense<0.000000e+00> : vector<16x128xf32>
    %50 = tpu.matmul %47, %49, %cst_54 {dimension_numbers = #tpu.dot_dimension_numbers<[1], [0], [0], [1], [0, 0, 1, 1], [], []>} : vector<16x128xf32>, vector<128x128xf32>, vector<16x128xf32> -> vector<16x128xf32>
    %c1_55 = arith.constant 1 : index
    %c0_56 = arith.constant 0 : index
    %51 = vector.load %arg5[%c1_55, %c0_56] : memref<18x128xf32, #tpu.memory_space<vmem>>, vector<16x128xf32>
    %c1_57 = arith.constant 1 : index
    %c0_58 = arith.constant 0 : index
    %c0_59 = arith.constant 0 : index
    %52 = vector.load %arg2[%c1_57, %c0_58, %c0_59] : memref<3x128x128xf32, #tpu.memory_space<vmem>>, vector<1x128x128xf32>
    %53 = vector.shape_cast %52 : vector<1x128x128xf32> to vector<128x128xf32>
    %cst_60 = arith.constant dense<0.000000e+00> : vector<16x128xf32>
    %54 = tpu.matmul %51, %53, %cst_60 {dimension_numbers = #tpu.dot_dimension_numbers<[1], [0], [0], [1], [0, 0, 1, 1], [], []>} : vector<16x128xf32>, vector<128x128xf32>, vector<16x128xf32> -> vector<16x128xf32>
    %55 = arith.addf %50, %54 : vector<16x128xf32>
    %c2_61 = arith.constant 2 : index
    %c0_62 = arith.constant 0 : index
    %56 = vector.load %arg5[%c2_61, %c0_62] : memref<18x128xf32, #tpu.memory_space<vmem>>, vector<16x128xf32>
    %c2_63 = arith.constant 2 : index
    %c0_64 = arith.constant 0 : index
    %c0_65 = arith.constant 0 : index
    %57 = vector.load %arg2[%c2_63, %c0_64, %c0_65] : memref<3x128x128xf32, #tpu.memory_space<vmem>>, vector<1x128x128xf32>
    %58 = vector.shape_cast %57 : vector<1x128x128xf32> to vector<128x128xf32>
    %cst_66 = arith.constant dense<0.000000e+00> : vector<16x128xf32>
    %59 = tpu.matmul %56, %58, %cst_66 {dimension_numbers = #tpu.dot_dimension_numbers<[1], [0], [0], [1], [0, 0, 1, 1], [], []>} : vector<16x128xf32>, vector<128x128xf32>, vector<16x128xf32> -> vector<16x128xf32>
    %60 = arith.addf %55, %59 : vector<16x128xf32>
    %61 = arith.addf %60, %5 : vector<16x128xf32>
    %cst_67 = arith.constant 0.000000e+00 : f32
    %62 = vector.broadcast %cst_67 : f32 to vector<16x128xf32>
    %63 = arith.maximumf %61, %62 : vector<16x128xf32>
    %c0_68 = arith.constant 0 : index
    %c0_69 = arith.constant 0 : index
    %c0_70 = arith.constant 0 : index
    %64 = vector.load %arg4[%c0_68, %c0_69, %c0_70] : memref<1x16x128xf32, #tpu.memory_space<vmem>>, vector<1x16x128xf32>
    %65 = vector.shape_cast %64 : vector<1x16x128xf32> to vector<16x128xf32>
    %66 = vector.shape_cast %63 : vector<16x128xf32> to vector<1x16x128xf32>
    tpu.vector_store %arg4[%c0_68, %c0_69, %c0_70], %66 {strides = array<i32>} : memref<1x16x128xf32, #tpu.memory_space<vmem>>, vector<1x16x128xf32>,
    return
  }
  func.func @transform_0(%arg0: i32) -> (i32, i32, i32) {
    %c0_i32 = arith.constant 0 : i32
    %c0_i32_0 = arith.constant 0 : i32
    %c0_i32_1 = arith.constant 0 : i32
    return %arg0, %c0_i32, %c0_i32_0 : i32, i32, i32
  }
  func.func @transform_1(%arg0: i32) -> (i32, i32, i32) {
    %c0_i32 = arith.constant 0 : i32
    %c0_i32_0 = arith.constant 0 : i32
    %c0_i32_1 = arith.constant 0 : i32
    %c0_i32_2 = arith.constant 0 : i32
    return %c0_i32, %c0_i32_0, %c0_i32_1 : i32, i32, i32
  }
  func.func @transform_2(%arg0: i32) -> (i32, i32) {
    %c0_i32 = arith.constant 0 : i32
    %c0_i32_0 = arith.constant 0 : i32
    %c0_i32_1 = arith.constant 0 : i32
    return %c0_i32, %c0_i32_0 : i32, i32
  }
  func.func @transform_3(%arg0: i32) -> (i32, i32, i32) {
    %c0_i32 = arith.constant 0 : i32
    %c0_i32_0 = arith.constant 0 : i32
    %c0_i32_1 = arith.constant 0 : i32
    return %arg0, %c0_i32, %c0_i32_0 : i32, i32, i32
  }
}

module attributes {stable_mosaic.version = 11 : i64} {
  func.func @_rc_full_kernel(%arg0: i32, %arg1: memref<1x16x128xf32, #tpu.memory_space<vmem>>, %arg2: memref<3x128x128xf32, #tpu.memory_space<vmem>>, %arg3: memref<1x128xf32, #tpu.memory_space<vmem>>, %arg4: memref<1x16x128xf32, #tpu.memory_space<vmem>>, %arg5: memref<18x128xf32, #tpu.memory_space<vmem>>) attributes {dimension_semantics = [#tpu.dimension_semantics<parallel>], iteration_bounds = array<i64: 2>, scalar_prefetch = 0 : i64, scratch_operands = 1 : i64, tpu.core_type = #tpu.core_type<tc>, window_params = [{transform_indices = @transform_0, window_bounds = array<i64: 1, 16, 128>}, {pipeline_mode = #tpu.pipeline_mode<synchronous>, transform_indices = @transform_1, window_bounds = array<i64: 3, 128, 128>}, {pipeline_mode = #tpu.pipeline_mode<synchronous>, transform_indices = @transform_2, window_bounds = array<i64: 1, 128>}, {transform_indices = @transform_3, window_bounds = array<i64: 1, 16, 128>}]} {
    %cst = arith.constant 0.000000e+00 : f32
    %0 = vector.broadcast %cst : f32 to vector<1x128xf32>
    %c0 = arith.constant 0 : index
    %c0_0 = arith.constant 0 : index
    %1 = vector.load %arg5[%c0, %c0_0] : memref<18x128xf32, #tpu.memory_space<vmem>>, vector<1x128xf32>
    tpu.vector_store %arg5[%c0, %c0_0], %0 {strides = array<i32>} : memref<18x128xf32, #tpu.memory_space<vmem>>, vector<1x128xf32>,
    %c17 = arith.constant 17 : index
    %c0_1 = arith.constant 0 : index
    %2 = vector.load %arg5[%c17, %c0_1] : memref<18x128xf32, #tpu.memory_space<vmem>>, vector<1x128xf32>
    tpu.vector_store %arg5[%c17, %c0_1], %0 {strides = array<i32>} : memref<18x128xf32, #tpu.memory_space<vmem>>, vector<1x128xf32>,
    %c0_2 = arith.constant 0 : index
    %c0_3 = arith.constant 0 : index
    %3 = vector.load %arg3[%c0_2, %c0_3] : memref<1x128xf32, #tpu.memory_space<vmem>>, vector<1x128xf32>
    %4 = vector.shape_cast %3 : vector<1x128xf32> to vector<1x128xf32>
    %5 = vector.broadcast %4 : vector<1x128xf32> to vector<16x128xf32>
    %c0_4 = arith.constant 0 : index
    %c0_5 = arith.constant 0 : index
    %c0_6 = arith.constant 0 : index
    %6 = vector.load %arg1[%c0_4, %c0_5, %c0_6] : memref<1x16x128xf32, #tpu.memory_space<vmem>>, vector<1x16x128xf32>
    %7 = vector.shape_cast %6 : vector<1x16x128xf32> to vector<16x128xf32>
    %c1 = arith.constant 1 : index
    %c0_7 = arith.constant 0 : index
    %8 = vector.load %arg5[%c1, %c0_7] : memref<18x128xf32, #tpu.memory_space<vmem>>, vector<16x128xf32>
    tpu.vector_store %arg5[%c1, %c0_7], %7 {strides = array<i32>} : memref<18x128xf32, #tpu.memory_space<vmem>>, vector<16x128xf32>,
    %c0_8 = arith.constant 0 : index
    %c0_9 = arith.constant 0 : index
    %9 = vector.load %arg5[%c0_8, %c0_9] : memref<18x128xf32, #tpu.memory_space<vmem>>, vector<16x128xf32>
    %c0_10 = arith.constant 0 : index
    %c0_11 = arith.constant 0 : index
    %c0_12 = arith.constant 0 : index
    %10 = vector.load %arg2[%c0_10, %c0_11, %c0_12] : memref<3x128x128xf32, #tpu.memory_space<vmem>>, vector<1x128x128xf32>
    %11 = vector.shape_cast %10 : vector<1x128x128xf32> to vector<128x128xf32>
    %cst_13 = arith.constant dense<0.000000e+00> : vector<16x128xf32>
    %12 = tpu.matmul %9, %11, %cst_13 {dimension_numbers = #tpu.dot_dimension_numbers<[1], [0], [0], [1], [0, 0, 1, 1], [], []>} : vector<16x128xf32>, vector<128x128xf32>, vector<16x128xf32> -> vector<16x128xf32>
    %c1_14 = arith.constant 1 : index
    %c0_15 = arith.constant 0 : index
    %13 = vector.load %arg5[%c1_14, %c0_15] : memref<18x128xf32, #tpu.memory_space<vmem>>, vector<16x128xf32>
    %c1_16 = arith.constant 1 : index
    %c0_17 = arith.constant 0 : index
    %c0_18 = arith.constant 0 : index
    %14 = vector.load %arg2[%c1_16, %c0_17, %c0_18] : memref<3x128x128xf32, #tpu.memory_space<vmem>>, vector<1x128x128xf32>
    %15 = vector.shape_cast %14 : vector<1x128x128xf32> to vector<128x128xf32>
    %cst_19 = arith.constant dense<0.000000e+00> : vector<16x128xf32>
    %16 = tpu.matmul %13, %15, %cst_19 {dimension_numbers = #tpu.dot_dimension_numbers<[1], [0], [0], [1], [0, 0, 1, 1], [], []>} : vector<16x128xf32>, vector<128x128xf32>, vector<16x128xf32> -> vector<16x128xf32>
    %17 = arith.addf %12, %16 : vector<16x128xf32>
    %c2 = arith.constant 2 : index
    %c0_20 = arith.constant 0 : index
    %18 = vector.load %arg5[%c2, %c0_20] : memref<18x128xf32, #tpu.memory_space<vmem>>, vector<16x128xf32>
    %c2_21 = arith.constant 2 : index
    %c0_22 = arith.constant 0 : index
    %c0_23 = arith.constant 0 : index
    %19 = vector.load %arg2[%c2_21, %c0_22, %c0_23] : memref<3x128x128xf32, #tpu.memory_space<vmem>>, vector<1x128x128xf32>
    %20 = vector.shape_cast %19 : vector<1x128x128xf32> to vector<128x128xf32>
    %cst_24 = arith.constant dense<0.000000e+00> : vector<16x128xf32>
    %21 = tpu.matmul %18, %20, %cst_24 {dimension_numbers = #tpu.dot_dimension_numbers<[1], [0], [0], [1], [0, 0, 1, 1], [], []>} : vector<16x128xf32>, vector<128x128xf32>, vector<16x128xf32> -> vector<16x128xf32>
    %22 = arith.addf %17, %21 : vector<16x128xf32>
    %23 = arith.addf %22, %5 : vector<16x128xf32>
    %cst_25 = arith.constant 0.000000e+00 : f32
    %24 = vector.broadcast %cst_25 : f32 to vector<16x128xf32>
    %25 = arith.maximumf %23, %24 : vector<16x128xf32>
    %26 = arith.addf %7, %25 : vector<16x128xf32>
    %c1_26 = arith.constant 1 : index
    %c0_27 = arith.constant 0 : index
    %27 = vector.load %arg5[%c1_26, %c0_27] : memref<18x128xf32, #tpu.memory_space<vmem>>, vector<16x128xf32>
    tpu.vector_store %arg5[%c1_26, %c0_27], %26 {strides = array<i32>} : memref<18x128xf32, #tpu.memory_space<vmem>>, vector<16x128xf32>,
    %c0_28 = arith.constant 0 : index
    %c0_29 = arith.constant 0 : index
    %28 = vector.load %arg5[%c0_28, %c0_29] : memref<18x128xf32, #tpu.memory_space<vmem>>, vector<16x128xf32>
    %c0_30 = arith.constant 0 : index
    %c0_31 = arith.constant 0 : index
    %c0_32 = arith.constant 0 : index
    %29 = vector.load %arg2[%c0_30, %c0_31, %c0_32] : memref<3x128x128xf32, #tpu.memory_space<vmem>>, vector<1x128x128xf32>
    %30 = vector.shape_cast %29 : vector<1x128x128xf32> to vector<128x128xf32>
    %cst_33 = arith.constant dense<0.000000e+00> : vector<16x128xf32>
    %31 = tpu.matmul %28, %30, %cst_33 {dimension_numbers = #tpu.dot_dimension_numbers<[1], [0], [0], [1], [0, 0, 1, 1], [], []>} : vector<16x128xf32>, vector<128x128xf32>, vector<16x128xf32> -> vector<16x128xf32>
    %c1_34 = arith.constant 1 : index
    %c0_35 = arith.constant 0 : index
    %32 = vector.load %arg5[%c1_34, %c0_35] : memref<18x128xf32, #tpu.memory_space<vmem>>, vector<16x128xf32>
    %c1_36 = arith.constant 1 : index
    %c0_37 = arith.constant 0 : index
    %c0_38 = arith.constant 0 : index
    %33 = vector.load %arg2[%c1_36, %c0_37, %c0_38] : memref<3x128x128xf32, #tpu.memory_space<vmem>>, vector<1x128x128xf32>
    %34 = vector.shape_cast %33 : vector<1x128x128xf32> to vector<128x128xf32>
    %cst_39 = arith.constant dense<0.000000e+00> : vector<16x128xf32>
    %35 = tpu.matmul %32, %34, %cst_39 {dimension_numbers = #tpu.dot_dimension_numbers<[1], [0], [0], [1], [0, 0, 1, 1], [], []>} : vector<16x128xf32>, vector<128x128xf32>, vector<16x128xf32> -> vector<16x128xf32>
    %36 = arith.addf %31, %35 : vector<16x128xf32>
    %c2_40 = arith.constant 2 : index
    %c0_41 = arith.constant 0 : index
    %37 = vector.load %arg5[%c2_40, %c0_41] : memref<18x128xf32, #tpu.memory_space<vmem>>, vector<16x128xf32>
    %c2_42 = arith.constant 2 : index
    %c0_43 = arith.constant 0 : index
    %c0_44 = arith.constant 0 : index
    %38 = vector.load %arg2[%c2_42, %c0_43, %c0_44] : memref<3x128x128xf32, #tpu.memory_space<vmem>>, vector<1x128x128xf32>
    %39 = vector.shape_cast %38 : vector<1x128x128xf32> to vector<128x128xf32>
    %cst_45 = arith.constant dense<0.000000e+00> : vector<16x128xf32>
    %40 = tpu.matmul %37, %39, %cst_45 {dimension_numbers = #tpu.dot_dimension_numbers<[1], [0], [0], [1], [0, 0, 1, 1], [], []>} : vector<16x128xf32>, vector<128x128xf32>, vector<16x128xf32> -> vector<16x128xf32>
    %41 = arith.addf %36, %40 : vector<16x128xf32>
    %42 = arith.addf %41, %5 : vector<16x128xf32>
    %cst_46 = arith.constant 0.000000e+00 : f32
    %43 = vector.broadcast %cst_46 : f32 to vector<16x128xf32>
    %44 = arith.maximumf %42, %43 : vector<16x128xf32>
    %45 = arith.addf %7, %44 : vector<16x128xf32>
    %c1_47 = arith.constant 1 : index
    %c0_48 = arith.constant 0 : index
    %46 = vector.load %arg5[%c1_47, %c0_48] : memref<18x128xf32, #tpu.memory_space<vmem>>, vector<16x128xf32>
    tpu.vector_store %arg5[%c1_47, %c0_48], %45 {strides = array<i32>} : memref<18x128xf32, #tpu.memory_space<vmem>>, vector<16x128xf32>,
    %c0_49 = arith.constant 0 : index
    %c0_50 = arith.constant 0 : index
    %47 = vector.load %arg5[%c0_49, %c0_50] : memref<18x128xf32, #tpu.memory_space<vmem>>, vector<16x128xf32>
    %c0_51 = arith.constant 0 : index
    %c0_52 = arith.constant 0 : index
    %c0_53 = arith.constant 0 : index
    %48 = vector.load %arg2[%c0_51, %c0_52, %c0_53] : memref<3x128x128xf32, #tpu.memory_space<vmem>>, vector<1x128x128xf32>
    %49 = vector.shape_cast %48 : vector<1x128x128xf32> to vector<128x128xf32>
    %cst_54 = arith.constant dense<0.000000e+00> : vector<16x128xf32>
    %50 = tpu.matmul %47, %49, %cst_54 {dimension_numbers = #tpu.dot_dimension_numbers<[1], [0], [0], [1], [0, 0, 1, 1], [], []>} : vector<16x128xf32>, vector<128x128xf32>, vector<16x128xf32> -> vector<16x128xf32>
    %c1_55 = arith.constant 1 : index
    %c0_56 = arith.constant 0 : index
    %51 = vector.load %arg5[%c1_55, %c0_56] : memref<18x128xf32, #tpu.memory_space<vmem>>, vector<16x128xf32>
    %c1_57 = arith.constant 1 : index
    %c0_58 = arith.constant 0 : index
    %c0_59 = arith.constant 0 : index
    %52 = vector.load %arg2[%c1_57, %c0_58, %c0_59] : memref<3x128x128xf32, #tpu.memory_space<vmem>>, vector<1x128x128xf32>
    %53 = vector.shape_cast %52 : vector<1x128x128xf32> to vector<128x128xf32>
    %cst_60 = arith.constant dense<0.000000e+00> : vector<16x128xf32>
    %54 = tpu.matmul %51, %53, %cst_60 {dimension_numbers = #tpu.dot_dimension_numbers<[1], [0], [0], [1], [0, 0, 1, 1], [], []>} : vector<16x128xf32>, vector<128x128xf32>, vector<16x128xf32> -> vector<16x128xf32>
    %55 = arith.addf %50, %54 : vector<16x128xf32>
    %c2_61 = arith.constant 2 : index
    %c0_62 = arith.constant 0 : index
    %56 = vector.load %arg5[%c2_61, %c0_62] : memref<18x128xf32, #tpu.memory_space<vmem>>, vector<16x128xf32>
    %c2_63 = arith.constant 2 : index
    %c0_64 = arith.constant 0 : index
    %c0_65 = arith.constant 0 : index
    %57 = vector.load %arg2[%c2_63, %c0_64, %c0_65] : memref<3x128x128xf32, #tpu.memory_space<vmem>>, vector<1x128x128xf32>
    %58 = vector.shape_cast %57 : vector<1x128x128xf32> to vector<128x128xf32>
    %cst_66 = arith.constant dense<0.000000e+00> : vector<16x128xf32>
    %59 = tpu.matmul %56, %58, %cst_66 {dimension_numbers = #tpu.dot_dimension_numbers<[1], [0], [0], [1], [0, 0, 1, 1], [], []>} : vector<16x128xf32>, vector<128x128xf32>, vector<16x128xf32> -> vector<16x128xf32>
    %60 = arith.addf %55, %59 : vector<16x128xf32>
    %61 = arith.addf %60, %5 : vector<16x128xf32>
    %cst_67 = arith.constant 0.000000e+00 : f32
    %62 = vector.broadcast %cst_67 : f32 to vector<16x128xf32>
    %63 = arith.maximumf %61, %62 : vector<16x128xf32>
    %c0_68 = arith.constant 0 : index
    %c0_69 = arith.constant 0 : index
    %c0_70 = arith.constant 0 : index
    %64 = vector.load %arg4[%c0_68, %c0_69, %c0_70] : memref<1x16x128xf32, #tpu.memory_space<vmem>>, vector<1x16x128xf32>
    %65 = vector.shape_cast %64 : vector<1x16x128xf32> to vector<16x128xf32>
    %66 = vector.shape_cast %63 : vector<16x128xf32> to vector<1x16x128xf32>
    tpu.vector_store %arg4[%c0_68, %c0_69, %c0_70], %66 {strides = array<i32>} : memref<1x16x128xf32, #tpu.memory_space<vmem>>, vector<1x16x128xf32>,
    return
  }
  func.func @transform_0(%arg0: i32) -> (i32, i32, i32) {
    %c0_i32 = arith.constant 0 : i32
    %c0_i32_0 = arith.constant 0 : i32
    %c0_i32_1 = arith.constant 0 : i32
    return %arg0, %c0_i32, %c0_i32_0 : i32, i32, i32
  }
  func.func @transform_1(%arg0: i32) -> (i32, i32, i32) {
    %c0_i32 = arith.constant 0 : i32
    %c0_i32_0 = arith.constant 0 : i32
    %c0_i32_1 = arith.constant 0 : i32
    %c0_i32_2 = arith.constant 0 : i32
    return %c0_i32, %c0_i32_0, %c0_i32_1 : i32, i32, i32
  }
  func.func @transform_2(%arg0: i32) -> (i32, i32) {
    %c0_i32 = arith.constant 0 : i32
    %c0_i32_0 = arith.constant 0 : i32
    %c0_i32_1 = arith.constant 0 : i32
    return %c0_i32, %c0_i32_0 : i32, i32
  }
  func.func @transform_3(%arg0: i32) -> (i32, i32, i32) {
    %c0_i32 = arith.constant 0 : i32
    %c0_i32_0 = arith.constant 0 : i32
    %c0_i32_1 = arith.constant 0 : i32
    return %arg0, %c0_i32, %c0_i32_0 : i32, i32, i32
  }
}

</mosaic_0001>

<llo_original>
// kernel: tile.8
$region0: #{tile.8}
  #allocation0 [shape = 's32[1]{0}', space=sflag, size = 0x4, scoped, tag = 'scoped memory for tile.8']
  %s0 = inlined_call_operand.vmem [shape: f32[8], index: 0, kind: input, shape index: {}]
  %s1 = inlined_call_operand.vmem [shape: f32[16,8], index: 1, kind: output, shape index: {}]
  // Predicated region
  $region2: #{tile.8} parent=0 // pred_check
    _
  $region3: #{tile.8} parent=0 // pred_check_branch
    %3 = sbr.rel (0) target = $region5
  $region4: #{tile.8} parent=0 // pred_region
    _
  $region5: #{tile.8} parent=0 // pred_fallthru
    _
  %v4 = vld [vmem:[%s0] ss:$0 sm:$0xff]
  %5 = vst [vmem:[%s1] sm:$0xff] %v4
  %s6 = scalar_lea.vmem %s1, 8
  %7 = vst [vmem:[%s6] sm:$0xff] %v4

// kernel: tile.9
$region0: #{tile.9}
  %s0 = inlined_call_operand.vmem [shape: f32[16,8], index: 0, kind: input, shape index: {}]
  %s1 = inlined_call_operand.vmem [shape: f32[1,128], index: 1, kind: output, shape index: {}]
  $region1: #{tile.9} parent=0
    #allocation0 [shape = 'u8[4096]{0}', space=vmem, size = 0x1000, scoped, tag = 'scoped mem for output reshape']
    %v2 = vld [vmem:[%s0] sm:$0x1]
    %vm3 = vcmask 64512
    %4 = vst.msk [vmem:[#allocation0] sm:$0x1] %vm3, %v2
    %s5 = scalar_lea.vmem %s0, 15
    %v6 = vld [vmem:[%s5] sm:$0x1]
    %7 = vrot.lane.b32.xlu0 %v6, 120
    %v8 = vpop.permute.xlu0 %7
    %vm9 = vcmask 1048512
    %10 = vst.msk [vmem:[#allocation0] sm:$0x1] %vm9, %v8
    %s11 = scalar_lea.vmem %s0, 14
    %v12 = vld [vmem:[%s11] sm:$0x1]
    %13 = vrot.lane.b32.xlu0 %v12, 112
    %v14 = vpop.permute.xlu0 %13
    %vm15 = vcmask 982912
    %16 = vst.msk [vmem:[#allocation0] sm:$0x1] %vm15, %v14
    %s17 = scalar_lea.vmem %s0, 13
    %v18 = vld [vmem:[%s17] sm:$0x1]
    %19 = vrot.lane.b32.xlu0 %v18, 104
    %v20 = vpop.permute.xlu0 %19
    %vm21 = vcmask 917312
    %22 = vst.msk [vmem:[#allocation0] sm:$0x1] %vm21, %v20
    %s23 = scalar_lea.vmem %s0, 12
    %v24 = vld [vmem:[%s23] sm:$0x1]
    %25 = vrot.lane.b32.xlu0 %v24, 96
    %v26 = vpop.permute.xlu0 %25
    %vm27 = vcmask 851712
    %28 = vst.msk [vmem:[#allocation0] sm:$0x1] %vm27, %v26
    %s29 = scalar_lea.vmem %s0, 11
    %v30 = vld [vmem:[%s29] sm:$0x1]
    %31 = vrot.lane.b32.xlu0 %v30, 88
    %v32 = vpop.permute.xlu0 %31
    %vm33 = vcmask 786112
    %34 = vst.msk [vmem:[#allocation0] sm:$0x1] %vm33, %v32
    %s35 = scalar_lea.vmem %s0, 10
    %v36 = vld [vmem:[%s35] sm:$0x1]
    %37 = vrot.lane.b32.xlu0 %v36, 80
    %v38 = vpop.permute.xlu0 %37
    %vm39 = vcmask 720512
    %40 = vst.msk [vmem:[#allocation0] sm:$0x1] %vm39, %v38
    %s41 = scalar_lea.vmem %s0, 9
    %v42 = vld [vmem:[%s41] sm:$0x1]
    %43 = vrot.lane.b32.xlu0 %v42, 72
    %v44 = vpop.permute.xlu0 %43
    %vm45 = vcmask 654912
    %46 = vst.msk [vmem:[#allocation0] sm:$0x1] %vm45, %v44
    %s47 = scalar_lea.vmem %s0, 8
    %v48 = vld [vmem:[%s47] sm:$0x1]
    %49 = vrot.lane.b32.xlu0 %v48, 64
    %v50 = vpop.permute.xlu0 %49
    %vm51 = vcmask 589312
    %52 = vst.msk [vmem:[#allocation0] sm:$0x1] %vm51, %v50
    %s53 = scalar_lea.vmem %s0, 7
    %v54 = vld [vmem:[%s53] sm:$0x1]
    %55 = vrot.lane.b32.xlu0 %v54, 56
    %v56 = vpop.permute.xlu0 %55
    %vm57 = vcmask 523712
    %58 = vst.msk [vmem:[#allocation0] sm:$0x1] %vm57, %v56
    %s59 = scalar_lea.vmem %s0, 6
    %v60 = vld [vmem:[%s59] sm:$0x1]
    %61 = vrot.lane.b32.xlu0 %v60, 48
    %v62 = vpop.permute.xlu0 %61
    %vm63 = vcmask 458112
    %64 = vst.msk [vmem:[#allocation0] sm:$0x1] %vm63, %v62
    %s65 = scalar_lea.vmem %s0, 5
    %v66 = vld [vmem:[%s65] sm:$0x1]
    %67 = vrot.lane.b32.xlu0 %v66, 40
    %v68 = vpop.permute.xlu0 %67
    %vm69 = vcmask 392512
    %70 = vst.msk [vmem:[#allocation0] sm:$0x1] %vm69, %v68
    %s71 = scalar_lea.vmem %s0, 4
    %v72 = vld [vmem:[%s71] sm:$0x1]
    %73 = vrot.lane.b32.xlu0 %v72, 32
    %v74 = vpop.permute.xlu0 %73
    %vm75 = vcmask 326912
    %76 = vst.msk [vmem:[#allocation0] sm:$0x1] %vm75, %v74
    %s77 = scalar_lea.vmem %s0, 3
    %v78 = vld [vmem:[%s77] sm:$0x1]
    %79 = vrot.lane.b32.xlu0 %v78, 24
    %v80 = vpop.permute.xlu0 %79
    %vm81 = vcmask 261312
    %82 = vst.msk [vmem:[#allocation0] sm:$0x1] %vm81, %v80
    %s83 = scalar_lea.vmem %s0, 2
    %v84 = vld [vmem:[%s83] sm:$0x1]
    %85 = vrot.lane.b32.xlu0 %v84, 16
    %v86 = vpop.permute.xlu0 %85
    %vm87 = vcmask 195712
    %88 = vst.msk [vmem:[#allocation0] sm:$0x1] %vm87, %v86
    %s89 = scalar_lea.vmem %s0, 1
    %v90 = vld [vmem:[%s89] sm:$0x1]
    %91 = vrot.lane.b32.xlu0 %v90, 8
    %v92 = vpop.permute.xlu0 %91
    %vm93 = vcmask 130112
    %94 = vst.msk [vmem:[#allocation0] sm:$0x1] %vm93, %v92
    %s96 = sshllo.u32 0, 1
    %v98 = vld [vmem:[#allocation0] sm:%s96]
    %s99 = sshllo.u32 0, 1
    %100 = vst [vmem:[%s1] sm:%s99] %v98

// kernel: rc_block.1
$region0: #{rc_block.1}
  #allocation0 [shape = 'u32[]', space=smem, size = 0x4, offset = 0x4, fixed_abs, tag = 'smem constant byte address 0x4 - core index']
  #allocation1 [shape = 'u32[144,128]{1,0:T(1,128)}', space=vmem, size = 0x12000, scoped, tag = 'internal scratch']
  #allocation2 [shape = 'f32[18,128]{1,0:T(8,128)}', space=vmem, size = 0x3000, scoped, tag = 'scratch operand']
  %s0 = inlined_call_operand.vmem [shape: f32[2,16,128], index: 0, kind: input, shape index: {}]
  %s1 = inlined_call_operand.vmem [shape: f32[3,128,128], index: 1, kind: input, shape index: {}]
  %s2 = inlined_call_operand.vmem [shape: f32[1,128], index: 2, kind: input, shape index: {}]
  %s3 = inlined_call_operand.vmem [shape: f32[2,16,128], index: 3, kind: output, shape index: {}]
  %s4 = sld [smem:[#allocation0]]
  $region45: #{rc_block.1} parent=0
    _
  %s6 = ssub.s32 1, %s4
  %s7 = scalar_select 0, %s6, %s4
  loop: start=0, step=1, limit=4
  $region2: #{rc_block.1} parent=0 // loop_pre_header
    _
  $region3: #{rc_block.1} parent=0 // loop_header
    %s9 = sphi 0, %s13
    %p10 = scmp.ge.s32.totalorder %s9, 4
    %s19 = sphi 0, %s21
    %s22 = sphi 0, %s19
    %s23 = sphi 0, %s22
    %s39 = sphi 0, %s23
    %s43 = sphi 0, %s43
    %s45 = sphi 0, %s43
    %s46 = sphi 0, %s45
    %s60 = sphi 0, %s46
    %s64 = sphi 0, %s64
    %s66 = sphi 0, %s64
    %s67 = sphi 0, %s66
    %s81 = sphi 0, %s67
    %s87 = sphi 0, %s89
    %s90 = sphi 0, %s87
    %s91 = sphi 0, %s90
    %s107 = sphi 0, %s91
  $region4: #{rc_block.1} parent=0 // loop_header_branch
    %12 = sbr.rel (%p10) target = $region8
  $region5: #{rc_block.1} parent=0 // loop_body
    %s14 = ssub.s32 %s9, 1
    %s15 = ssub.s32 %s9, 2
    %s16 = sadd.s32 %s9, 1
    %s17 = ssub.s32 %s9, %s16
    %p18 = scmp.eq.s32.totalorder %s17, 0
    %s20 = sadd.s32 %s19, 1
    %s21 = scalar_select %p18, %s19, %s20
    %p24 = pneg %p18
    %p25 = scmp.eq.s32.totalorder %s9, 1
    %p26 = por %p24, %p25
    %p27 = scmp.ne.s32.totalorder %s19, %s22
    %p28 = scmp.eq.s32.totalorder %s9, 0
    %p29 = por %p27, %p28
    %p30 = scmp.ne.s32.totalorder %s19, %s22
    %p31 = scmp.eq.s32.totalorder %s14, 1
    %p32 = por %p30, %p31
    %p33 = scmp.ne.s32.totalorder %s22, %s23
    %p34 = scmp.eq.s32.totalorder %s14, 0
    %p35 = por %p33, %p34
    %p36 = scmp.ne.s32.totalorder %s22, %s23
    %p37 = scmp.eq.s32.totalorder %s15, 1
    %p38 = por %p36, %p37
    %p40 = scmp.ne.s32.totalorder %s23, %s39
    %p41 = scmp.eq.s32.totalorder %s15, 0
    %p42 = por %p40, %p41
    %s44 = sadd.s32 %s43, 1
    %p47 = scmp.eq.s32.totalorder %s9, 1
    %p48 = scmp.ne.s32.totalorder %s43, %s45
    %p49 = scmp.eq.s32.totalorder %s9, 0
    %p50 = por %p48, %p49
    %p51 = scmp.ne.s32.totalorder %s43, %s45
    %p52 = scmp.eq.s32.totalorder %s14, 1
    %p53 = por %p51, %p52
    %p54 = scmp.ne.s32.totalorder %s45, %s46
    %p55 = scmp.eq.s32.totalorder %s14, 0
    %p56 = por %p54, %p55
    %p57 = scmp.ne.s32.totalorder %s45, %s46
    %p58 = scmp.eq.s32.totalorder %s15, 1
    %p59 = por %p57, %p58
    %p61 = scmp.ne.s32.totalorder %s46, %s60
    %p62 = scmp.eq.s32.totalorder %s15, 0
    %p63 = por %p61, %p62
    %s65 = sadd.s32 %s64, 1
    %p68 = scmp.eq.s32.totalorder %s9, 1
    %p69 = scmp.ne.s32.totalorder %s64, %s66
    %p70 = scmp.eq.s32.totalorder %s9, 0
    %p71 = por %p69, %p70
    %p72 = scmp.ne.s32.totalorder %s64, %s66
    %p73 = scmp.eq.s32.totalorder %s14, 1
    %p74 = por %p72, %p73
    %p75 = scmp.ne.s32.totalorder %s66, %s67
    %p76 = scmp.eq.s32.totalorder %s14, 0
    %p77 = por %p75, %p76
    %p78 = scmp.ne.s32.totalorder %s66, %s67
    %p79 = scmp.eq.s32.totalorder %s15, 1
    %p80 = por %p78, %p79
    %p82 = scmp.ne.s32.totalorder %s67, %s81
    %p83 = scmp.eq.s32.totalorder %s15, 0
    %p84 = por %p82, %p83
    %s85 = ssub.s32 %s9, %s16
    %p86 = scmp.eq.s32.totalorder %s85, 0
    %s88 = sadd.s32 %s87, 1
    %s89 = scalar_select %p86, %s87, %s88
    %p92 = pneg %p86
    %p93 = scmp.eq.s32.totalorder %s9, 1
    %p94 = por %p92, %p93
    %p95 = scmp.ne.s32.totalorder %s87, %s90
    %p96 = scmp.eq.s32.totalorder %s9, 0
    %p97 = por %p95, %p96
    %p98 = scmp.ne.s32.totalorder %s87, %s90
    %p99 = scmp.eq.s32.totalorder %s14, 1
    %p100 = por %p98, %p99
    %p101 = scmp.ne.s32.totalorder %s90, %s91
    %p102 = scmp.eq.s32.totalorder %s14, 0
    %p103 = por %p101, %p102
    %p104 = scmp.ne.s32.totalorder %s90, %s91
    %p105 = scmp.eq.s32.totalorder %s15, 1
    %p106 = por %p104, %p105
    %p108 = scmp.ne.s32.totalorder %s91, %s107
    %p109 = scmp.eq.s32.totalorder %s15, 0
    %p110 = por %p108, %p109
    %p111 = scmp.le.s32.totalorder 1, %s9
    %p112 = scmp.lt.s32.totalorder %s9, 3
    %p113 = pnand %p111, %p112
    %p114 = pneg %p113
    // Predicated region
    $region9: #{rc_block.1} parent=5 // pred_check
      _
    $region10: #{rc_block.1} parent=5 // pred_check_branch
      %116 = sbr.rel (%p113) target = $region12
    $region11: #{rc_block.1} parent=5 // pred_region
      %s117 = ssub.s32 %s9, 1
      // Predicated region
      $region13: #{rc_block.1} parent=11 // pred_check
        %p118 = pneg %p56
      $region14: #{rc_block.1} parent=11 // pred_check_branch
        %120 = sbr.rel (%p118) target = $region16
      $region15: #{rc_block.1} parent=11 // pred_region
        _
      $region16: #{rc_block.1} parent=11 // pred_fallthru
        _
      // Predicated region
      $region17: #{rc_block.1} parent=11 // pred_check
        %p121 = pneg %p77
      $region18: #{rc_block.1} parent=11 // pred_check_branch
        %123 = sbr.rel (%p121) target = $region20
      $region19: #{rc_block.1} parent=11 // pred_region
        _
      $region20: #{rc_block.1} parent=11 // pred_fallthru
        _
    $region12: #{rc_block.1} parent=5 // pred_fallthru
      _
    %p124 = scmp.lt.s32.totalorder %s9, 2
    // Predicated region
    $region21: #{rc_block.1} parent=5 // pred_check
      %p125 = pneg %p124
    $region22: #{rc_block.1} parent=5 // pred_check_branch
      %127 = sbr.rel (%p125) target = $region24
    $region23: #{rc_block.1} parent=5 // pred_region
      // Predicated region
      $region25: #{rc_block.1} parent=23 // pred_check
        %p128 = pneg %p29
      $region26: #{rc_block.1} parent=23 // pred_check_branch
        %130 = sbr.rel (%p128) target = $region28
      $region27: #{rc_block.1} parent=23 // pred_region
        %p131 = scmp.lt.s32.totalorder %s9, 1
        %s132 = scalar_select %p131, %s9, 1
        %s133 = smul.addr %s132, 2
        %s134 = smul.addr %s133, 8
        %s135 = scalar_lea.vmem %s0, %s134
      $region28: #{rc_block.1} parent=23 // pred_fallthru
        _
    $region24: #{rc_block.1} parent=5 // pred_fallthru
      _
    %p136 = scmp.le.s32.totalorder 1, %s9
    %p137 = scmp.lt.s32.totalorder %s9, 3
    %p138 = pnand %p136, %p137
    %p139 = pneg %p138
    // Predicated region
    $region29: #{rc_block.1} parent=5 // pred_check
      _
    $region30: #{rc_block.1} parent=5 // pred_check_branch
      %141 = sbr.rel (%p138) target = $region32
    $region31: #{rc_block.1} parent=5 // pred_region
      %s142 = ssub.s32 %s9, 1
      %p143 = scmp.lt.s32.totalorder %s14, 1
      %s144 = scalar_select %p143, %s14, 1
      %s145 = smul.addr %s144, 2
      %s146 = smul.addr %s145, 8
      %s147 = scalar_lea.vmem %s0, %s146
      %p148 = pneg %p35
      %p149 = pneg %p32
      %p150 = pneg %p56
      %p151 = pneg %p53
      %p152 = pneg %p77
      %p153 = pneg %p74
      %p154 = pneg %p103
      %p155 = pneg %p100
      %p156 = scmp.lt.s32.totalorder %s14, 1
      %s157 = scalar_select %p156, %s14, 1
      %s158 = smul.addr %s157, 2
      %s159 = smul.addr %s158, 8
      %s160 = scalar_lea.vmem %s3, %s159
      %p161 = scmp.lt.s32.totalorder %s14, 1
      %s162 = scalar_select %p161, %s14, 1
      %s163 = smul.addr %s162, 2
      %s164 = smul.addr %s163, 8
      %s165 = scalar_lea.vmem %s0, %s164
      %p166 = scmp.lt.s32.totalorder %s14, 1
      %s167 = scalar_select %p166, %s14, 1
      %s168 = smul.addr %s167, 2
      %s169 = smul.addr %s168, 8
      %s170 = scalar_lea.vmem %s3, %s169
      %171 = vst [vmem:[#allocation2] sm:$0x1] 0.0
      %172 = vst [vmem:[#allocation2 + $0x11] sm:$0x1] 0.0
      %v173 = vld [vmem:[%s2] sm:$0x1]
      %v175 = vlaneseq
      %v176 = vshrl.u32 %v175, 7
      %v177 = vsub.s32 0, %v176
      %v178 = vrot.slane %v173, %v177
      %v180 = vld [vmem:[%s165] sm:$0xff]
      %v181 = vld [vmem:[%s165 + $0x8] sm:$0xff]
      %182 = vst [vmem:[#allocation2 + $0x1] sm:$0xff] %v180
      %183 = vst [vmem:[#allocation2 + $0x9] sm:$0xff] %v181
      %v184 = vld [vmem:[#allocation2] sm:$0xff]
      %v185 = vld [vmem:[#allocation2 + $0x8] sm:$0xff]
      %v186 = vld [vmem:[%s1] sm:$0xff]
      %v187 = vld [vmem:[%s1 + $0x8] sm:$0xff]
      %v188 = vld [vmem:[%s1 + $0x10] sm:$0xff]
      %v189 = vld [vmem:[%s1 + $0x18] sm:$0xff]
      %v190 = vld [vmem:[%s1 + $0x20] sm:$0xff]
      %v191 = vld [vmem:[%s1 + $0x28] sm:$0xff]
      %v192 = vld [vmem:[%s1 + $0x30] sm:$0xff]
      %v193 = vld [vmem:[%s1 + $0x38] sm:$0xff]
      %v194 = vld [vmem:[%s1 + $0x40] sm:$0xff]
      %v195 = vld [vmem:[%s1 + $0x48] sm:$0xff]
      %v196 = vld [vmem:[%s1 + $0x50] sm:$0xff]
      %v197 = vld [vmem:[%s1 + $0x58] sm:$0xff]
      %v198 = vld [vmem:[%s1 + $0x60] sm:$0xff]
      %v199 = vld [vmem:[%s1 + $0x68] sm:$0xff]
      %v200 = vld [vmem:[%s1 + $0x70] sm:$0xff]
      %v201 = vld [vmem:[%s1 + $0x78] sm:$0xff]
      %v202 = vld [vmem:[#allocation2 + $0x1] sm:$0xff]
      %v203 = vld [vmem:[#allocation2 + $0x9] sm:$0xff]
      %s204 = scalar_lea.vmem %s1, 128
      %v205 = vld [vmem:[%s204] sm:$0xff]
      %v206 = vld [vmem:[%s204 + $0x8] sm:$0xff]
      %v207 = vld [vmem:[%s204 + $0x10] sm:$0xff]
      %v208 = vld [vmem:[%s204 + $0x18] sm:$0xff]
      %v209 = vld [vmem:[%s204 + $0x20] sm:$0xff]
      %v210 = vld [vmem:[%s204 + $0x28] sm:$0xff]
      %v211 = vld [vmem:[%s204 + $0x30] sm:$0xff]
      %v212 = vld [vmem:[%s204 + $0x38] sm:$0xff]
      %v213 = vld [vmem:[%s204 + $0x40] sm:$0xff]
      %v214 = vld [vmem:[%s204 + $0x48] sm:$0xff]
      %v215 = vld [vmem:[%s204 + $0x50] sm:$0xff]
      %v216 = vld [vmem:[%s204 + $0x58] sm:$0xff]
      %v217 = vld [vmem:[%s204 + $0x60] sm:$0xff]
      %v218 = vld [vmem:[%s204 + $0x68] sm:$0xff]
      %v219 = vld [vmem:[%s204 + $0x70] sm:$0xff]
      %v220 = vld [vmem:[%s204 + $0x78] sm:$0xff]
      %221 = vmatprep.subr.mxu0 0.0
      %222 = vmatpush1.msra.mxu0 %v205
      %223 = vmatprep.subr.mxu0 0.0
      %224 = vmatpush1.msra.mxu0 %v206
      %225 = vmatprep.subr.mxu0 0.0
      %226 = vmatpush1.msra.mxu0 %v207
      %227 = vmatprep.subr.mxu0 0.0
      %228 = vmatpush1.msra.mxu0 %v208
      %229 = vmatprep.subr.mxu0 0.0
      %230 = vmatpush1.msra.mxu0 %v209
      %231 = vmatprep.subr.mxu0 0.0
      %232 = vmatpush1.msra.mxu0 %v210
      %233 = vmatprep.subr.mxu0 0.0
      %234 = vmatpush1.msra.mxu0 %v211
      %235 = vmatprep.subr.mxu0 0.0
      %236 = vmatpush1.msra.mxu0 %v212
      %237 = vmatprep.subr.mxu0 0.0
      %238 = vmatpush1.msra.mxu0 %v213
      %239 = vmatprep.subr.mxu0 0.0
      %240 = vmatpush1.msra.mxu0 %v214
      %241 = vmatprep.subr.mxu0 0.0
      %242 = vmatpush1.msra.mxu0 %v215
      %243 = vmatprep.subr.mxu0 0.0
      %244 = vmatpush1.msra.mxu0 %v216
      %245 = vmatprep.subr.mxu0 0.0
      %246 = vmatpush1.msra.mxu0 %v217
      %247 = vmatprep.subr.mxu0 0.0
      %248 = vmatpush1.msra.mxu0 %v218
      %249 = vmatprep.subr.mxu0 0.0
      %250 = vmatpush1.msra.mxu0 %v219
      %251 = vmatprep.subr.mxu0 0.0
      %252 = vmatpush1.msra.mxu0 %v220
      %253 = vmatprep.subr.mxu0 0.0
      %254 = vmatpush1.msra.mxu0 0.0
      %255 = vmatprep.subr.mxu0 0.0
      %256 = vmatpush1.msra.mxu0 0.0
      %257 = vmatprep.subr.mxu0 0.0
      %258 = vmatpush1.msra.mxu0 0.0
      %259 = vmatprep.subr.mxu0 0.0
      %260 = vmatpush1.msra.mxu0 0.0
      %261 = vmatprep.subr.mxu0 0.0
      %262 = vmatpush1.msra.mxu0 0.0
      %263 = vmatprep.subr.mxu0 0.0
      %264 = vmatpush1.msra.mxu0 0.0
      %265 = vmatprep.subr.mxu0 0.0
      %266 = vmatpush1.msra.mxu0 0.0
      %267 = vmatprep.subr.mxu0 0.0
      %268 = vmatpush1.msra.mxu0 0.0
      %269 = vmatprep.subr.mxu0 0.0
      %270 = vmatpush1.msra.mxu0 0.0
      %271 = vmatprep.subr.mxu0 0.0
      %272 = vmatpush1.msra.mxu0 0.0
      %273 = vmatprep.subr.mxu0 0.0
      %274 = vmatpush1.msra.mxu0 0.0
      %275 = vmatprep.subr.mxu0 0.0
      %276 = vmatpush1.msra.mxu0 0.0
      %277 = vmatprep.subr.mxu0 0.0
      %278 = vmatpush1.msra.mxu0 0.0
      %279 = vmatprep.subr.mxu0 0.0
      %280 = vmatpush1.msra.mxu0 0.0
      %281 = vmatprep.subr.mxu0 0.0
      %282 = vmatpush1.msra.mxu0 0.0
      %283 = vmatprep.subr.mxu0 0.0
      %284 = vmatpush1.msra.mxu0 0.0
      %285 = vmatprep.mubr.f32.mxu0 0.0
      %286 = vmatmul.mubr.f32.gmra.mrb[0].mxu0 %v202
      %v287 = vpop.f32.mrb[0].mxu0
      %v288 = vadd.f32 0.0, %v287
      %v289 = vpop.f32.mrb[0].mxu0
      %290 = vmatprep.mubr.f32.mxu0 0.0
      %291 = vmatmul.mubr.f32.gmra.mrb[0].mxu0 %v203
      %v292 = vpop.f32.mrb[0].mxu0
      %v293 = vadd.f32 0.0, %v292
      %v294 = vpop.f32.mrb[0].mxu0
      %295 = vdwg.mxu0
      %296 = vmatprep.subr.mxu0 0.0
      %297 = vmatpush1.msra.mxu0 %v186
      %298 = vmatprep.subr.mxu0 0.0
      %299 = vmatpush1.msra.mxu0 %v187
      %300 = vmatprep.subr.mxu0 0.0
      %301 = vmatpush1.msra.mxu0 %v188
      %302 = vmatprep.subr.mxu0 0.0
      %303 = vmatpush1.msra.mxu0 %v189
      %304 = vmatprep.subr.mxu0 0.0
      %305 = vmatpush1.msra.mxu0 %v190
      %306 = vmatprep.subr.mxu0 0.0
      %307 = vmatpush1.msra.mxu0 %v191
      %308 = vmatprep.subr.mxu0 0.0
      %309 = vmatpush1.msra.mxu0 %v192
      %310 = vmatprep.subr.mxu0 0.0
      %311 = vmatpush1.msra.mxu0 %v193
      %312 = vmatprep.subr.mxu0 0.0
      %313 = vmatpush1.msra.mxu0 %v194
      %314 = vmatprep.subr.mxu0 0.0
      %315 = vmatpush1.msra.mxu0 %v195
      %316 = vmatprep.subr.mxu0 0.0
      %317 = vmatpush1.msra.mxu0 %v196
      %318 = vmatprep.subr.mxu0 0.0
      %319 = vmatpush1.msra.mxu0 %v197
      %320 = vmatprep.subr.mxu0 0.0
      %321 = vmatpush1.msra.mxu0 %v198
      %322 = vmatprep.subr.mxu0 0.0
      %323 = vmatpush1.msra.mxu0 %v199
      %324 = vmatprep.subr.mxu0 0.0
      %325 = vmatpush1.msra.mxu0 %v200
      %326 = vmatprep.subr.mxu0 0.0
      %327 = vmatpush1.msra.mxu0 %v201
      %328 = vmatprep.subr.mxu0 0.0
      %329 = vmatpush1.msra.mxu0 0.0
      %330 = vmatprep.subr.mxu0 0.0
      %331 = vmatpush1.msra.mxu0 0.0
      %332 = vmatprep.subr.mxu0 0.0
      %333 = vmatpush1.msra.mxu0 0.0
      %334 = vmatprep.subr.mxu0 0.0
      %335 = vmatpush1.msra.mxu0 0.0
      %336 = vmatprep.subr.mxu0 0.0
      %337 = vmatpush1.msra.mxu0 0.0
      %338 = vmatprep.subr.mxu0 0.0
      %339 = vmatpush1.msra.mxu0 0.0
      %340 = vmatprep.subr.mxu0 0.0
      %341 = vmatpush1.msra.mxu0 0.0
      %342 = vmatprep.subr.mxu0 0.0
      %343 = vmatpush1.msra.mxu0 0.0
      %344 = vmatprep.subr.mxu0 0.0
      %345 = vmatpush1.msra.mxu0 0.0
      %346 = vmatprep.subr.mxu0 0.0
      %347 = vmatpush1.msra.mxu0 0.0
      %348 = vmatprep.subr.mxu0 0.0
      %349 = vmatpush1.msra.mxu0 0.0
      %350 = vmatprep.subr.mxu0 0.0
      %351 = vmatpush1.msra.mxu0 0.0
      %352 = vmatprep.subr.mxu0 0.0
      %353 = vmatpush1.msra.mxu0 0.0
      %354 = vmatprep.subr.mxu0 0.0
      %355 = vmatpush1.msra.mxu0 0.0
      %356 = vmatprep.subr.mxu0 0.0
      %357 = vmatpush1.msra.mxu0 0.0
      %358 = vmatprep.subr.mxu0 0.0
      %359 = vmatpush1.msra.mxu0 0.0
      %360 = vmatprep.mubr.f32.mxu0 0.0
      %361 = vmatmul.mubr.f32.gmra.mrb[0].mxu0 %v184
      %v362 = vpop.f32.mrb[0].mxu0
      %v363 = vadd.f32 %v288, %v362
      %v364 = vpop.f32.mrb[0].mxu0
      %365 = vmatprep.mubr.f32.mxu0 0.0
      %366 = vmatmul.mubr.f32.gmra.mrb[0].mxu0 %v185
      %v367 = vpop.f32.mrb[0].mxu0
      %v368 = vadd.f32 %v293, %v367
      %v369 = vpop.f32.mrb[0].mxu0
      %370 = vdwg.mxu0
      %v371 = vld [vmem:[#allocation2 + $0x2] sm:$0xff]
      %v372 = vld [vmem:[#allocation2 + $0xa] sm:$0xff]
      %s373 = scalar_lea.vmem %s1, 256
      %v374 = vld [vmem:[%s373] sm:$0xff]
      %v375 = vld [vmem:[%s373 + $0x8] sm:$0xff]
      %v376 = vld [vmem:[%s373 + $0x10] sm:$0xff]
      %v377 = vld [vmem:[%s373 + $0x18] sm:$0xff]
      %v378 = vld [vmem:[%s373 + $0x20] sm:$0xff]
      %v379 = vld [vmem:[%s373 + $0x28] sm:$0xff]
      %v380 = vld [vmem:[%s373 + $0x30] sm:$0xff]
      %v381 = vld [vmem:[%s373 + $0x38] sm:$0xff]
      %v382 = vld [vmem:[%s373 + $0x40] sm:$0xff]
      %v383 = vld [vmem:[%s373 + $0x48] sm:$0xff]
      %v384 = vld [vmem:[%s373 + $0x50] sm:$0xff]
      %v385 = vld [vmem:[%s373 + $0x58] sm:$0xff]
      %v386 = vld [vmem:[%s373 + $0x60] sm:$0xff]
      %v387 = vld [vmem:[%s373 + $0x68] sm:$0xff]
      %v388 = vld [vmem:[%s373 + $0x70] sm:$0xff]
      %v389 = vld [vmem:[%s373 + $0x78] sm:$0xff]
      %390 = vmatprep.subr.mxu0 0.0
      %391 = vmatpush1.msra.mxu0 %v374
      %392 = vmatprep.subr.mxu0 0.0
      %393 = vmatpush1.msra.mxu0 %v375
      %394 = vmatprep.subr.mxu0 0.0
      %395 = vmatpush1.msra.mxu0 %v376
      %396 = vmatprep.subr.mxu0 0.0
      %397 = vmatpush1.msra.mxu0 %v377
      %398 = vmatprep.subr.mxu0 0.0
      %399 = vmatpush1.msra.mxu0 %v378
      %400 = vmatprep.subr.mxu0 0.0
      %401 = vmatpush1.msra.mxu0 %v379
      %402 = vmatprep.subr.mxu0 0.0
      %403 = vmatpush1.msra.mxu0 %v380
      %404 = vmatprep.subr.mxu0 0.0
      %405 = vmatpush1.msra.mxu0 %v381
      %406 = vmatprep.subr.mxu0 0.0
      %407 = vmatpush1.msra.mxu0 %v382
      %408 = vmatprep.subr.mxu0 0.0
      %409 = vmatpush1.msra.mxu0 %v383
      %410 = vmatprep.subr.mxu0 0.0
      %411 = vmatpush1.msra.mxu0 %v384
      %412 = vmatprep.subr.mxu0 0.0
      %413 = vmatpush1.msra.mxu0 %v385
      %414 = vmatprep.subr.mxu0 0.0
      %415 = vmatpush1.msra.mxu0 %v386
      %416 = vmatprep.subr.mxu0 0.0
      %417 = vmatpush1.msra.mxu0 %v387
      %418 = vmatprep.subr.mxu0 0.0
      %419 = vmatpush1.msra.mxu0 %v388
      %420 = vmatprep.subr.mxu0 0.0
      %421 = vmatpush1.msra.mxu0 %v389
      %422 = vmatprep.subr.mxu0 0.0
      %423 = vmatpush1.msra.mxu0 0.0
      %424 = vmatprep.subr.mxu0 0.0
      %425 = vmatpush1.msra.mxu0 0.0
      %426 = vmatprep.subr.mxu0 0.0
      %427 = vmatpush1.msra.mxu0 0.0
      %428 = vmatprep.subr.mxu0 0.0
      %429 = vmatpush1.msra.mxu0 0.0
      %430 = vmatprep.subr.mxu0 0.0
      %431 = vmatpush1.msra.mxu0 0.0
      %432 = vmatprep.subr.mxu0 0.0
      %433 = vmatpush1.msra.mxu0 0.0
      %434 = vmatprep.subr.mxu0 0.0
      %435 = vmatpush1.msra.mxu0 0.0
      %436 = vmatprep.subr.mxu0 0.0
      %437 = vmatpush1.msra.mxu0 0.0
      %438 = vmatprep.subr.mxu0 0.0
      %439 = vmatpush1.msra.mxu0 0.0
      %440 = vmatprep.subr.mxu0 0.0
      %441 = vmatpush1.msra.mxu0 0.0
      %442 = vmatprep.subr.mxu0 0.0
      %443 = vmatpush1.msra.mxu0 0.0
      %444 = vmatprep.subr.mxu0 0.0
      %445 = vmatpush1.msra.mxu0 0.0
      %446 = vmatprep.subr.mxu0 0.0
      %447 = vmatpush1.msra.mxu0 0.0
      %448 = vmatprep.subr.mxu0 0.0
      %449 = vmatpush1.msra.mxu0 0.0
      %450 = vmatprep.subr.mxu0 0.0
      %451 = vmatpush1.msra.mxu0 0.0
      %452 = vmatprep.subr.mxu0 0.0
      %453 = vmatpush1.msra.mxu0 0.0
      %454 = vmatprep.mubr.f32.mxu0 0.0
      %455 = vmatmul.mubr.f32.gmra.mrb[0].mxu0 %v371
      %v456 = vpop.f32.mrb[0].mxu0
      %v457 = vadd.f32 0.0, %v456
      %v458 = vpop.f32.mrb[0].mxu0
      %459 = vmatprep.mubr.f32.mxu0 0.0
      %460 = vmatmul.mubr.f32.gmra.mrb[0].mxu0 %v372
      %v461 = vpop.f32.mrb[0].mxu0
      %v462 = vadd.f32 0.0, %v461
      %v463 = vpop.f32.mrb[0].mxu0
      %464 = vdwg.mxu0
      %v465 = vadd.f32 %v363, %v457
      %v466 = vadd.f32 %v368, %v462
      %v467 = vadd.f32 %v465, %v178
      %v468 = vadd.f32 %v466, %v178
      %v469 = vmax.f32 %v467, 0.0
      %v470 = vmax.f32 %v468, 0.0
      %v471 = vadd.f32 %v180, %v469
      %v472 = vadd.f32 %v181, %v470
      %473 = vst [vmem:[#allocation2 + $0x1] sm:$0xff] %v471
      %474 = vst [vmem:[#allocation2 + $0x9] sm:$0xff] %v472
      %v475 = vld [vmem:[#allocation2] sm:$0xff]
      %v476 = vld [vmem:[#allocation2 + $0x8] sm:$0xff]
      %v477 = vld [vmem:[%s1] sm:$0xff]
      %v478 = vld [vmem:[%s1 + $0x8] sm:$0xff]
      %v479 = vld [vmem:[%s1 + $0x10] sm:$0xff]
      %v480 = vld [vmem:[%s1 + $0x18] sm:$0xff]
      %v481 = vld [vmem:[%s1 + $0x20] sm:$0xff]
      %v482 = vld [vmem:[%s1 + $0x28] sm:$0xff]
      %v483 = vld [vmem:[%s1 + $0x30] sm:$0xff]
      %v484 = vld [vmem:[%s1 + $0x38] sm:$0xff]
      %v485 = vld [vmem:[%s1 + $0x40] sm:$0xff]
      %v486 = vld [vmem:[%s1 + $0x48] sm:$0xff]
      %v487 = vld [vmem:[%s1 + $0x50] sm:$0xff]
      %v488 = vld [vmem:[%s1 + $0x58] sm:$0xff]
      %v489 = vld [vmem:[%s1 + $0x60] sm:$0xff]
      %v490 = vld [vmem:[%s1 + $0x68] sm:$0xff]
      %v491 = vld [vmem:[%s1 + $0x70] sm:$0xff]
      %v492 = vld [vmem:[%s1 + $0x78] sm:$0xff]
      %v493 = vld [vmem:[#allocation2 + $0x1] sm:$0xff]
      %v494 = vld [vmem:[#allocation2 + $0x9] sm:$0xff]
      %v495 = vld [vmem:[%s204] sm:$0xff]
      %v496 = vld [vmem:[%s204 + $0x8] sm:$0xff]
      %v497 = vld [vmem:[%s204 + $0x10] sm:$0xff]
      %v498 = vld [vmem:[%s204 + $0x18] sm:$0xff]
      %v499 = vld [vmem:[%s204 + $0x20] sm:$0xff]
      %v500 = vld [vmem:[%s204 + $0x28] sm:$0xff]
      %v501 = vld [vmem:[%s204 + $0x30] sm:$0xff]
      %v502 = vld [vmem:[%s204 + $0x38] sm:$0xff]
      %v503 = vld [vmem:[%s204 + $0x40] sm:$0xff]
      %v504 = vld [vmem:[%s204 + $0x48] sm:$0xff]
      %v505 = vld [vmem:[%s204 + $0x50] sm:$0xff]
      %v506 = vld [vmem:[%s204 + $0x58] sm:$0xff]
      %v507 = vld [vmem:[%s204 + $0x60] sm:$0xff]
      %v508 = vld [vmem:[%s204 + $0x68] sm:$0xff]
      %v509 = vld [vmem:[%s204 + $0x70] sm:$0xff]
      %v510 = vld [vmem:[%s204 + $0x78] sm:$0xff]
      %511 = vmatprep.subr.mxu0 0.0
      %512 = vmatpush1.msra.mxu0 %v495
      %513 = vmatprep.subr.mxu0 0.0
      %514 = vmatpush1.msra.mxu0 %v496
      %515 = vmatprep.subr.mxu0 0.0
      %516 = vmatpush1.msra.mxu0 %v497
      %517 = vmatprep.subr.mxu0 0.0
      %518 = vmatpush1.msra.mxu0 %v498
      %519 = vmatprep.subr.mxu0 0.0
      %520 = vmatpush1.msra.mxu0 %v499
      %521 = vmatprep.subr.mxu0 0.0
      %522 = vmatpush1.msra.mxu0 %v500
      %523 = vmatprep.subr.mxu0 0.0
      %524 = vmatpush1.msra.mxu0 %v501
      %525 = vmatprep.subr.mxu0 0.0
      %526 = vmatpush1.msra.mxu0 %v502
      %527 = vmatprep.subr.mxu0 0.0
      %528 = vmatpush1.msra.mxu0 %v503
      %529 = vmatprep.subr.mxu0 0.0
      %530 = vmatpush1.msra.mxu0 %v504
      %531 = vmatprep.subr.mxu0 0.0
      %532 = vmatpush1.msra.mxu0 %v505
      %533 = vmatprep.subr.mxu0 0.0
      %534 = vmatpush1.msra.mxu0 %v506
      %535 = vmatprep.subr.mxu0 0.0
      %536 = vmatpush1.msra.mxu0 %v507
      %537 = vmatprep.subr.mxu0 0.0
      %538 = vmatpush1.msra.mxu0 %v508
      %539 = vmatprep.subr.mxu0 0.0
      %540 = vmatpush1.msra.mxu0 %v509
      %541 = vmatprep.subr.mxu0 0.0
      %542 = vmatpush1.msra.mxu0 %v510
      %543 = vmatprep.subr.mxu0 0.0
      %544 = vmatpush1.msra.mxu0 0.0
      %545 = vmatprep.subr.mxu0 0.0
      %546 = vmatpush1.msra.mxu0 0.0
      %547 = vmatprep.subr.mxu0 0.0
      %548 = vmatpush1.msra.mxu0 0.0
      %549 = vmatprep.subr.mxu0 0.0
      %550 = vmatpush1.msra.mxu0 0.0
      %551 = vmatprep.subr.mxu0 0.0
      %552 = vmatpush1.msra.mxu0 0.0
      %553 = vmatprep.subr.mxu0 0.0
      %554 = vmatpush1.msra.mxu0 0.0
      %555 = vmatprep.subr.mxu0 0.0
      %556 = vmatpush1.msra.mxu0 0.0
      %557 = vmatprep.subr.mxu0 0.0
      %558 = vmatpush1.msra.mxu0 0.0
      %559 = vmatprep.subr.mxu0 0.0
      %560 = vmatpush1.msra.mxu0 0.0
      %561 = vmatprep.subr.mxu0 0.0
      %562 = vmatpush1.msra.mxu0 0.0
      %563 = vmatprep.subr.mxu0 0.0
      %564 = vmatpush1.msra.mxu0 0.0
      %565 = vmatprep.subr.mxu0 0.0
      %566 = vmatpush1.msra.mxu0 0.0
      %567 = vmatprep.subr.mxu0 0.0
      %568 = vmatpush1.msra.mxu0 0.0
      %569 = vmatprep.subr.mxu0 0.0
      %570 = vmatpush1.msra.mxu0 0.0
      %571 = vmatprep.subr.mxu0 0.0
      %572 = vmatpush1.msra.mxu0 0.0
      %573 = vmatprep.subr.mxu0 0.0
      %574 = vmatpush1.msra.mxu0 0.0
      %575 = vmatprep.mubr.f32.mxu0 0.0
      %576 = vmatmul.mubr.f32.gmra.mrb[0].mxu0 %v493
      %v577 = vpop.f32.mrb[0].mxu0
      %v578 = vadd.f32 0.0, %v577
      %v579 = vpop.f32.mrb[0].mxu0
      %580 = vmatprep.mubr.f32.mxu0 0.0
      %581 = vmatmul.mubr.f32.gmra.mrb[0].mxu0 %v494
      %v582 = vpop.f32.mrb[0].mxu0
      %v583 = vadd.f32 0.0, %v582
      %v584 = vpop.f32.mrb[0].mxu0
      %585 = vdwg.mxu0
      %586 = vmatprep.subr.mxu0 0.0
      %587 = vmatpush1.msra.mxu0 %v477
      %588 = vmatprep.subr.mxu0 0.0
      %589 = vmatpush1.msra.mxu0 %v478
      %590 = vmatprep.subr.mxu0 0.0
      %591 = vmatpush1.msra.mxu0 %v479
      %592 = vmatprep.subr.mxu0 0.0
      %593 = vmatpush1.msra.mxu0 %v480
      %594 = vmatprep.subr.mxu0 0.0
      %595 = vmatpush1.msra.mxu0 %v481
      %596 = vmatprep.subr.mxu0 0.0
      %597 = vmatpush1.msra.mxu0 %v482
      %598 = vmatprep.subr.mxu0 0.0
      %599 = vmatpush1.msra.mxu0 %v483
      %600 = vmatprep.subr.mxu0 0.0
      %601 = vmatpush1.msra.mxu0 %v484
      %602 = vmatprep.subr.mxu0 0.0
      %603 = vmatpush1.msra.mxu0 %v485
      %604 = vmatprep.subr.mxu0 0.0
      %605 = vmatpush1.msra.mxu0 %v486
      %606 = vmatprep.subr.mxu0 0.0
      %607 = vmatpush1.msra.mxu0 %v487
      %608 = vmatprep.subr.mxu0 0.0
      %609 = vmatpush1.msra.mxu0 %v488
      %610 = vmatprep.subr.mxu0 0.0
      %611 = vmatpush1.msra.mxu0 %v489
      %612 = vmatprep.subr.mxu0 0.0
      %613 = vmatpush1.msra.mxu0 %v490
      %614 = vmatprep.subr.mxu0 0.0
      %615 = vmatpush1.msra.mxu0 %v491
      %616 = vmatprep.subr.mxu0 0.0
      %617 = vmatpush1.msra.mxu0 %v492
      %618 = vmatprep.subr.mxu0 0.0
      %619 = vmatpush1.msra.mxu0 0.0
      %620 = vmatprep.subr.mxu0 0.0
      %621 = vmatpush1.msra.mxu0 0.0
      %622 = vmatprep.subr.mxu0 0.0
      %623 = vmatpush1.msra.mxu0 0.0
      %624 = vmatprep.subr.mxu0 0.0
      %625 = vmatpush1.msra.mxu0 0.0
      %626 = vmatprep.subr.mxu0 0.0
      %627 = vmatpush1.msra.mxu0 0.0
      %628 = vmatprep.subr.mxu0 0.0
      %629 = vmatpush1.msra.mxu0 0.0
      %630 = vmatprep.subr.mxu0 0.0
      %631 = vmatpush1.msra.mxu0 0.0
      %632 = vmatprep.subr.mxu0 0.0
      %633 = vmatpush1.msra.mxu0 0.0
      %634 = vmatprep.subr.mxu0 0.0
      %635 = vmatpush1.msra.mxu0 0.0
      %636 = vmatprep.subr.mxu0 0.0
      %637 = vmatpush1.msra.mxu0 0.0
      %638 = vmatprep.subr.mxu0 0.0
      %639 = vmatpush1.msra.mxu0 0.0
      %640 = vmatprep.subr.mxu0 0.0
      %641 = vmatpush1.msra.mxu0 0.0
      %642 = vmatprep.subr.mxu0 0.0
      %643 = vmatpush1.msra.mxu0 0.0
      %644 = vmatprep.subr.mxu0 0.0
      %645 = vmatpush1.msra.mxu0 0.0
      %646 = vmatprep.subr.mxu0 0.0
      %647 = vmatpush1.msra.mxu0 0.0
      %648 = vmatprep.subr.mxu0 0.0
      %649 = vmatpush1.msra.mxu0 0.0
      %650 = vmatprep.mubr.f32.mxu0 0.0
      %651 = vmatmul.mubr.f32.gmra.mrb[0].mxu0 %v475
      %v652 = vpop.f32.mrb[0].mxu0
      %v653 = vadd.f32 %v578, %v652
      %v654 = vpop.f32.mrb[0].mxu0
      %655 = vmatprep.mubr.f32.mxu0 0.0
      %656 = vmatmul.mubr.f32.gmra.mrb[0].mxu0 %v476
      %v657 = vpop.f32.mrb[0].mxu0
      %v658 = vadd.f32 %v583, %v657
      %v659 = vpop.f32.mrb[0].mxu0
      %660 = vdwg.mxu0
      %v661 = vld [vmem:[#allocation2 + $0x2] sm:$0xff]
      %v662 = vld [vmem:[#allocation2 + $0xa] sm:$0xff]
      %v663 = vld [vmem:[%s373] sm:$0xff]
      %v664 = vld [vmem:[%s373 + $0x8] sm:$0xff]
      %v665 = vld [vmem:[%s373 + $0x10] sm:$0xff]
      %v666 = vld [vmem:[%s373 + $0x18] sm:$0xff]
      %v667 = vld [vmem:[%s373 + $0x20] sm:$0xff]
      %v668 = vld [vmem:[%s373 + $0x28] sm:$0xff]
      %v669 = vld [vmem:[%s373 + $0x30] sm:$0xff]
      %v670 = vld [vmem:[%s373 + $0x38] sm:$0xff]
      %v671 = vld [vmem:[%s373 + $0x40] sm:$0xff]
      %v672 = vld [vmem:[%s373 + $0x48] sm:$0xff]
      %v673 = vld [vmem:[%s373 + $0x50] sm:$0xff]
      %v674 = vld [vmem:[%s373 + $0x58] sm:$0xff]
      %v675 = vld [vmem:[%s373 + $0x60] sm:$0xff]
      %v676 = vld [vmem:[%s373 + $0x68] sm:$0xff]
      %v677 = vld [vmem:[%s373 + $0x70] sm:$0xff]
      %v678 = vld [vmem:[%s373 + $0x78] sm:$0xff]
      %679 = vmatprep.subr.mxu0 0.0
      %680 = vmatpush1.msra.mxu0 %v663
      %681 = vmatprep.subr.mxu0 0.0
      %682 = vmatpush1.msra.mxu0 %v664
      %683 = vmatprep.subr.mxu0 0.0
      %684 = vmatpush1.msra.mxu0 %v665
      %685 = vmatprep.subr.mxu0 0.0
      %686 = vmatpush1.msra.mxu0 %v666
      %687 = vmatprep.subr.mxu0 0.0
      %688 = vmatpush1.msra.mxu0 %v667
      %689 = vmatprep.subr.mxu0 0.0
      %690 = vmatpush1.msra.mxu0 %v668
      %691 = vmatprep.subr.mxu0 0.0
      %692 = vmatpush1.msra.mxu0 %v669
      %693 = vmatprep.subr.mxu0 0.0
      %694 = vmatpush1.msra.mxu0 %v670
      %695 = vmatprep.subr.mxu0 0.0
      %696 = vmatpush1.msra.mxu0 %v671
      %697 = vmatprep.subr.mxu0 0.0
      %698 = vmatpush1.msra.mxu0 %v672
      %699 = vmatprep.subr.mxu0 0.0
      %700 = vmatpush1.msra.mxu0 %v673
      %701 = vmatprep.subr.mxu0 0.0
      %702 = vmatpush1.msra.mxu0 %v674
      %703 = vmatprep.subr.mxu0 0.0
      %704 = vmatpush1.msra.mxu0 %v675
      %705 = vmatprep.subr.mxu0 0.0
      %706 = vmatpush1.msra.mxu0 %v676
      %707 = vmatprep.subr.mxu0 0.0
      %708 = vmatpush1.msra.mxu0 %v677
      %709 = vmatprep.subr.mxu0 0.0
      %710 = vmatpush1.msra.mxu0 %v678
      %711 = vmatprep.subr.mxu0 0.0
      %712 = vmatpush1.msra.mxu0 0.0
      %713 = vmatprep.subr.mxu0 0.0
      %714 = vmatpush1.msra.mxu0 0.0
      %715 = vmatprep.subr.mxu0 0.0
      %716 = vmatpush1.msra.mxu0 0.0
      %717 = vmatprep.subr.mxu0 0.0
      %718 = vmatpush1.msra.mxu0 0.0
      %719 = vmatprep.subr.mxu0 0.0
      %720 = vmatpush1.msra.mxu0 0.0
      %721 = vmatprep.subr.mxu0 0.0
      %722 = vmatpush1.msra.mxu0 0.0
      %723 = vmatprep.subr.mxu0 0.0
      %724 = vmatpush1.msra.mxu0 0.0
      %725 = vmatprep.subr.mxu0 0.0
      %726 = vmatpush1.msra.mxu0 0.0
      %727 = vmatprep.subr.mxu0 0.0
      %728 = vmatpush1.msra.mxu0 0.0
      %729 = vmatprep.subr.mxu0 0.0
      %730 = vmatpush1.msra.mxu0 0.0
      %731 = vmatprep.subr.mxu0 0.0
      %732 = vmatpush1.msra.mxu0 0.0
      %733 = vmatprep.subr.mxu0 0.0
      %734 = vmatpush1.msra.mxu0 0.0
      %735 = vmatprep.subr.mxu0 0.0
      %736 = vmatpush1.msra.mxu0 0.0
      %737 = vmatprep.subr.mxu0 0.0
      %738 = vmatpush1.msra.mxu0 0.0
      %739 = vmatprep.subr.mxu0 0.0
      %740 = vmatpush1.msra.mxu0 0.0
      %741 = vmatprep.subr.mxu0 0.0
      %742 = vmatpush1.msra.mxu0 0.0
      %743 = vmatprep.mubr.f32.mxu0 0.0
      %744 = vmatmul.mubr.f32.gmra.mrb[0].mxu0 %v661
      %v745 = vpop.f32.mrb[0].mxu0
      %v746 = vadd.f32 0.0, %v745
      %v747 = vpop.f32.mrb[0].mxu0
      %748 = vmatprep.mubr.f32.mxu0 0.0
      %749 = vmatmul.mubr.f32.gmra.mrb[0].mxu0 %v662
      %v750 = vpop.f32.mrb[0].mxu0
      %v751 = vadd.f32 0.0, %v750
      %v752 = vpop.f32.mrb[0].mxu0
      %753 = vdwg.mxu0
      %v754 = vadd.f32 %v653, %v746
      %v755 = vadd.f32 %v658, %v751
      %v756 = vadd.f32 %v754, %v178
      %v757 = vadd.f32 %v755, %v178
      %v758 = vmax.f32 %v756, 0.0
      %v759 = vmax.f32 %v757, 0.0
      %v760 = vadd.f32 %v180, %v758
      %v761 = vadd.f32 %v181, %v759
      %762 = vst [vmem:[#allocation2 + $0x1] sm:$0xff] %v760
      %763 = vst [vmem:[#allocation2 + $0x9] sm:$0xff] %v761
      %v764 = vld [vmem:[#allocation2] sm:$0xff]
      %v765 = vld [vmem:[#allocation2 + $0x8] sm:$0xff]
      %v766 = vld [vmem:[%s1] sm:$0xff]
      %v767 = vld [vmem:[%s1 + $0x8] sm:$0xff]
      %v768 = vld [vmem:[%s1 + $0x10] sm:$0xff]
      %v769 = vld [vmem:[%s1 + $0x18] sm:$0xff]
      %v770 = vld [vmem:[%s1 + $0x20] sm:$0xff]
      %v771 = vld [vmem:[%s1 + $0x28] sm:$0xff]
      %v772 = vld [vmem:[%s1 + $0x30] sm:$0xff]
      %v773 = vld [vmem:[%s1 + $0x38] sm:$0xff]
      %v774 = vld [vmem:[%s1 + $0x40] sm:$0xff]
      %v775 = vld [vmem:[%s1 + $0x48] sm:$0xff]
      %v776 = vld [vmem:[%s1 + $0x50] sm:$0xff]
      %v777 = vld [vmem:[%s1 + $0x58] sm:$0xff]
      %v778 = vld [vmem:[%s1 + $0x60] sm:$0xff]
      %v779 = vld [vmem:[%s1 + $0x68] sm:$0xff]
      %v780 = vld [vmem:[%s1 + $0x70] sm:$0xff]
      %v781 = vld [vmem:[%s1 + $0x78] sm:$0xff]
      %v782 = vld [vmem:[#allocation2 + $0x1] sm:$0xff]
      %v783 = vld [vmem:[#allocation2 + $0x9] sm:$0xff]
      %v784 = vld [vmem:[%s204] sm:$0xff]
      %v785 = vld [vmem:[%s204 + $0x8] sm:$0xff]
      %v786 = vld [vmem:[%s204 + $0x10] sm:$0xff]
      %v787 = vld [vmem:[%s204 + $0x18] sm:$0xff]
      %v788 = vld [vmem:[%s204 + $0x20] sm:$0xff]
      %v789 = vld [vmem:[%s204 + $0x28] sm:$0xff]
      %v790 = vld [vmem:[%s204 + $0x30] sm:$0xff]
      %v791 = vld [vmem:[%s204 + $0x38] sm:$0xff]
      %v792 = vld [vmem:[%s204 + $0x40] sm:$0xff]
      %v793 = vld [vmem:[%s204 + $0x48] sm:$0xff]
      %v794 = vld [vmem:[%s204 + $0x50] sm:$0xff]
      %v795 = vld [vmem:[%s204 + $0x58] sm:$0xff]
      %v796 = vld [vmem:[%s204 + $0x60] sm:$0xff]
      %v797 = vld [vmem:[%s204 + $0x68] sm:$0xff]
      %v798 = vld [vmem:[%s204 + $0x70] sm:$0xff]
      %v799 = vld [vmem:[%s204 + $0x78] sm:$0xff]
      %800 = vmatprep.subr.mxu0 0.0
      %801 = vmatpush1.msra.mxu0 %v784
      %802 = vmatprep.subr.mxu0 0.0
      %803 = vmatpush1.msra.mxu0 %v785
      %804 = vmatprep.subr.mxu0 0.0
      %805 = vmatpush1.msra.mxu0 %v786
      %806 = vmatprep.subr.mxu0 0.0
      %807 = vmatpush1.msra.mxu0 %v787
      %808 = vmatprep.subr.mxu0 0.0
      %809 = vmatpush1.msra.mxu0 %v788
      %810 = vmatprep.subr.mxu0 0.0
      %811 = vmatpush1.msra.mxu0 %v789
      %812 = vmatprep.subr.mxu0 0.0
      %813 = vmatpush1.msra.mxu0 %v790
      %814 = vmatprep.subr.mxu0 0.0
      %815 = vmatpush1.msra.mxu0 %v791
      %816 = vmatprep.subr.mxu0 0.0
      %817 = vmatpush1.msra.mxu0 %v792
      %818 = vmatprep.subr.mxu0 0.0
      %819 = vmatpush1.msra.mxu0 %v793
      %820 = vmatprep.subr.mxu0 0.0
      %821 = vmatpush1.msra.mxu0 %v794
      %822 = vmatprep.subr.mxu0 0.0
      %823 = vmatpush1.msra.mxu0 %v795
      %824 = vmatprep.subr.mxu0 0.0
      %825 = vmatpush1.msra.mxu0 %v796
      %826 = vmatprep.subr.mxu0 0.0
      %827 = vmatpush1.msra.mxu0 %v797
      %828 = vmatprep.subr.mxu0 0.0
      %829 = vmatpush1.msra.mxu0 %v798
      %830 = vmatprep.subr.mxu0 0.0
      %831 = vmatpush1.msra.mxu0 %v799
      %832 = vmatprep.subr.mxu0 0.0
      %833 = vmatpush1.msra.mxu0 0.0
      %834 = vmatprep.subr.mxu0 0.0
      %835 = vmatpush1.msra.mxu0 0.0
      %836 = vmatprep.subr.mxu0 0.0
      %837 = vmatpush1.msra.mxu0 0.0
      %838 = vmatprep.subr.mxu0 0.0
      %839 = vmatpush1.msra.mxu0 0.0
      %840 = vmatprep.subr.mxu0 0.0
      %841 = vmatpush1.msra.mxu0 0.0
      %842 = vmatprep.subr.mxu0 0.0
      %843 = vmatpush1.msra.mxu0 0.0
      %844 = vmatprep.subr.mxu0 0.0
      %845 = vmatpush1.msra.mxu0 0.0
      %846 = vmatprep.subr.mxu0 0.0
      %847 = vmatpush1.msra.mxu0 0.0
      %848 = vmatprep.subr.mxu0 0.0
      %849 = vmatpush1.msra.mxu0 0.0
      %850 = vmatprep.subr.mxu0 0.0
      %851 = vmatpush1.msra.mxu0 0.0
      %852 = vmatprep.subr.mxu0 0.0
      %853 = vmatpush1.msra.mxu0 0.0
      %854 = vmatprep.subr.mxu0 0.0
      %855 = vmatpush1.msra.mxu0 0.0
      %856 = vmatprep.subr.mxu0 0.0
      %857 = vmatpush1.msra.mxu0 0.0
      %858 = vmatprep.subr.mxu0 0.0
      %859 = vmatpush1.msra.mxu0 0.0
      %860 = vmatprep.subr.mxu0 0.0
      %861 = vmatpush1.msra.mxu0 0.0
      %862 = vmatprep.subr.mxu0 0.0
      %863 = vmatpush1.msra.mxu0 0.0
      %864 = vmatprep.mubr.f32.mxu0 0.0
      %865 = vmatmul.mubr.f32.gmra.mrb[0].mxu0 %v782
      %v866 = vpop.f32.mrb[0].mxu0
      %v867 = vadd.f32 0.0, %v866
      %v868 = vpop.f32.mrb[0].mxu0
      %869 = vmatprep.mubr.f32.mxu0 0.0
      %870 = vmatmul.mubr.f32.gmra.mrb[0].mxu0 %v783
      %v871 = vpop.f32.mrb[0].mxu0
      %v872 = vadd.f32 0.0, %v871
      %v873 = vpop.f32.mrb[0].mxu0
      %874 = vdwg.mxu0
      %875 = vmatprep.subr.mxu0 0.0
      %876 = vmatpush1.msra.mxu0 %v766
      %877 = vmatprep.subr.mxu0 0.0
      %878 = vmatpush1.msra.mxu0 %v767
      %879 = vmatprep.subr.mxu0 0.0
      %880 = vmatpush1.msra.mxu0 %v768
      %881 = vmatprep.subr.mxu0 0.0
      %882 = vmatpush1.msra.mxu0 %v769
      %883 = vmatprep.subr.mxu0 0.0
      %884 = vmatpush1.msra.mxu0 %v770
      %885 = vmatprep.subr.mxu0 0.0
      %886 = vmatpush1.msra.mxu0 %v771
      %887 = vmatprep.subr.mxu0 0.0
      %888 = vmatpush1.msra.mxu0 %v772
      %889 = vmatprep.subr.mxu0 0.0
      %890 = vmatpush1.msra.mxu0 %v773
      %891 = vmatprep.subr.mxu0 0.0
      %892 = vmatpush1.msra.mxu0 %v774
      %893 = vmatprep.subr.mxu0 0.0
      %894 = vmatpush1.msra.mxu0 %v775
      %895 = vmatprep.subr.mxu0 0.0
      %896 = vmatpush1.msra.mxu0 %v776
      %897 = vmatprep.subr.mxu0 0.0
      %898 = vmatpush1.msra.mxu0 %v777
      %899 = vmatprep.subr.mxu0 0.0
      %900 = vmatpush1.msra.mxu0 %v778
      %901 = vmatprep.subr.mxu0 0.0
      %902 = vmatpush1.msra.mxu0 %v779
      %903 = vmatprep.subr.mxu0 0.0
      %904 = vmatpush1.msra.mxu0 %v780
      %905 = vmatprep.subr.mxu0 0.0
      %906 = vmatpush1.msra.mxu0 %v781
      %907 = vmatprep.subr.mxu0 0.0
      %908 = vmatpush1.msra.mxu0 0.0
      %909 = vmatprep.subr.mxu0 0.0
      %910 = vmatpush1.msra.mxu0 0.0
      %911 = vmatprep.subr.mxu0 0.0
      %912 = vmatpush1.msra.mxu0 0.0
      %913 = vmatprep.subr.mxu0 0.0
      %914 = vmatpush1.msra.mxu0 0.0
      %915 = vmatprep.subr.mxu0 0.0
      %916 = vmatpush1.msra.mxu0 0.0
      %917 = vmatprep.subr.mxu0 0.0
      %918 = vmatpush1.msra.mxu0 0.0
      %919 = vmatprep.subr.mxu0 0.0
      %920 = vmatpush1.msra.mxu0 0.0
      %921 = vmatprep.subr.mxu0 0.0
      %922 = vmatpush1.msra.mxu0 0.0
      %923 = vmatprep.subr.mxu0 0.0
      %924 = vmatpush1.msra.mxu0 0.0
      %925 = vmatprep.subr.mxu0 0.0
      %926 = vmatpush1.msra.mxu0 0.0
      %927 = vmatprep.subr.mxu0 0.0
      %928 = vmatpush1.msra.mxu0 0.0
      %929 = vmatprep.subr.mxu0 0.0
      %930 = vmatpush1.msra.mxu0 0.0
      %931 = vmatprep.subr.mxu0 0.0
      %932 = vmatpush1.msra.mxu0 0.0
      %933 = vmatprep.subr.mxu0 0.0
      %934 = vmatpush1.msra.mxu0 0.0
      %935 = vmatprep.subr.mxu0 0.0
      %936 = vmatpush1.msra.mxu0 0.0
      %937 = vmatprep.subr.mxu0 0.0
      %938 = vmatpush1.msra.mxu0 0.0
      %939 = vmatprep.mubr.f32.mxu0 0.0
      %940 = vmatmul.mubr.f32.gmra.mrb[0].mxu0 %v764
      %v941 = vpop.f32.mrb[0].mxu0
      %v942 = vadd.f32 %v867, %v941
      %v943 = vpop.f32.mrb[0].mxu0
      %944 = vmatprep.mubr.f32.mxu0 0.0
      %945 = vmatmul.mubr.f32.gmra.mrb[0].mxu0 %v765
      %v946 = vpop.f32.mrb[0].mxu0
      %v947 = vadd.f32 %v872, %v946
      %v948 = vpop.f32.mrb[0].mxu0
      %949 = vdwg.mxu0
      %v950 = vld [vmem:[#allocation2 + $0x2] sm:$0xff]
      %v951 = vld [vmem:[#allocation2 + $0xa] sm:$0xff]
      %v952 = vld [vmem:[%s373] sm:$0xff]
      %v953 = vld [vmem:[%s373 + $0x8] sm:$0xff]
      %v954 = vld [vmem:[%s373 + $0x10] sm:$0xff]
      %v955 = vld [vmem:[%s373 + $0x18] sm:$0xff]
      %v956 = vld [vmem:[%s373 + $0x20] sm:$0xff]
      %v957 = vld [vmem:[%s373 + $0x28] sm:$0xff]
      %v958 = vld [vmem:[%s373 + $0x30] sm:$0xff]
      %v959 = vld [vmem:[%s373 + $0x38] sm:$0xff]
      %v960 = vld [vmem:[%s373 + $0x40] sm:$0xff]
      %v961 = vld [vmem:[%s373 + $0x48] sm:$0xff]
      %v962 = vld [vmem:[%s373 + $0x50] sm:$0xff]
      %v963 = vld [vmem:[%s373 + $0x58] sm:$0xff]
      %v964 = vld [vmem:[%s373 + $0x60] sm:$0xff]
      %v965 = vld [vmem:[%s373 + $0x68] sm:$0xff]
      %v966 = vld [vmem:[%s373 + $0x70] sm:$0xff]
      %v967 = vld [vmem:[%s373 + $0x78] sm:$0xff]
      %968 = vmatprep.subr.mxu0 0.0
      %969 = vmatpush1.msra.mxu0 %v952
      %970 = vmatprep.subr.mxu0 0.0
      %971 = vmatpush1.msra.mxu0 %v953
      %972 = vmatprep.subr.mxu0 0.0
      %973 = vmatpush1.msra.mxu0 %v954
      %974 = vmatprep.subr.mxu0 0.0
      %975 = vmatpush1.msra.mxu0 %v955
      %976 = vmatprep.subr.mxu0 0.0
      %977 = vmatpush1.msra.mxu0 %v956
      %978 = vmatprep.subr.mxu0 0.0
      %979 = vmatpush1.msra.mxu0 %v957
      %980 = vmatprep.subr.mxu0 0.0
      %981 = vmatpush1.msra.mxu0 %v958
      %982 = vmatprep.subr.mxu0 0.0
      %983 = vmatpush1.msra.mxu0 %v959
      %984 = vmatprep.subr.mxu0 0.0
      %985 = vmatpush1.msra.mxu0 %v960
      %986 = vmatprep.subr.mxu0 0.0
      %987 = vmatpush1.msra.mxu0 %v961
      %988 = vmatprep.subr.mxu0 0.0
      %989 = vmatpush1.msra.mxu0 %v962
      %990 = vmatprep.subr.mxu0 0.0
      %991 = vmatpush1.msra.mxu0 %v963
      %992 = vmatprep.subr.mxu0 0.0
      %993 = vmatpush1.msra.mxu0 %v964
      %994 = vmatprep.subr.mxu0 0.0
      %995 = vmatpush1.msra.mxu0 %v965
      %996 = vmatprep.subr.mxu0 0.0
      %997 = vmatpush1.msra.mxu0 %v966
      %998 = vmatprep.subr.mxu0 0.0
      %999 = vmatpush1.msra.mxu0 %v967
      %1000 = vmatprep.subr.mxu0 0.0
      %1001 = vmatpush1.msra.mxu0 0.0
      %1002 = vmatprep.subr.mxu0 0.0
      %1003 = vmatpush1.msra.mxu0 0.0
      %1004 = vmatprep.subr.mxu0 0.0
      %1005 = vmatpush1.msra.mxu0 0.0
      %1006 = vmatprep.subr.mxu0 0.0
      %1007 = vmatpush1.msra.mxu0 0.0
      %1008 = vmatprep.subr.mxu0 0.0
      %1009 = vmatpush1.msra.mxu0 0.0
      %1010 = vmatprep.subr.mxu0 0.0
      %1011 = vmatpush1.msra.mxu0 0.0
      %1012 = vmatprep.subr.mxu0 0.0
      %1013 = vmatpush1.msra.mxu0 0.0
      %1014 = vmatprep.subr.mxu0 0.0
      %1015 = vmatpush1.msra.mxu0 0.0
      %1016 = vmatprep.subr.mxu0 0.0
      %1017 = vmatpush1.msra.mxu0 0.0
      %1018 = vmatprep.subr.mxu0 0.0
      %1019 = vmatpush1.msra.mxu0 0.0
      %1020 = vmatprep.subr.mxu0 0.0
      %1021 = vmatpush1.msra.mxu0 0.0
      %1022 = vmatprep.subr.mxu0 0.0
      %1023 = vmatpush1.msra.mxu0 0.0
      %1024 = vmatprep.subr.mxu0 0.0
      %1025 = vmatpush1.msra.mxu0 0.0
      %1026 = vmatprep.subr.mxu0 0.0
      %1027 = vmatpush1.msra.mxu0 0.0
      %1028 = vmatprep.subr.mxu0 0.0
      %1029 = vmatpush1.msra.mxu0 0.0
      %1030 = vmatprep.subr.mxu0 0.0
      %1031 = vmatpush1.msra.mxu0 0.0
      %1032 = vmatprep.mubr.f32.mxu0 0.0
      %1033 = vmatmul.mubr.f32.gmra.mrb[0].mxu0 %v950
      %v1034 = vpop.f32.mrb[0].mxu0
      %v1035 = vadd.f32 0.0, %v1034
      %v1036 = vpop.f32.mrb[0].mxu0
      %1037 = vmatprep.mubr.f32.mxu0 0.0
      %1038 = vmatmul.mubr.f32.gmra.mrb[0].mxu0 %v951
      %v1039 = vpop.f32.mrb[0].mxu0
      %v1040 = vadd.f32 0.0, %v1039
      %v1041 = vpop.f32.mrb[0].mxu0
      %1042 = vdwg.mxu0
      %v1043 = vadd.f32 %v942, %v1035
      %v1044 = vadd.f32 %v947, %v1040
      %v1045 = vadd.f32 %v1043, %v178
      %v1046 = vadd.f32 %v1044, %v178
      %v1047 = vmax.f32 %v1045, 0.0
      %v1048 = vmax.f32 %v1046, 0.0
      %1049 = vst [vmem:[%s170] sm:$0xff] %v1047
      %1050 = vst [vmem:[%s170 + $0x8] sm:$0xff] %v1048
      %p1051 = scmp.lt.s32.totalorder %s14, 1
      %s1052 = scalar_select %p1051, %s14, 1
      %s1053 = smul.addr %s1052, 2
      %s1054 = smul.addr %s1053, 8
      %s1055 = scalar_lea.vmem %s3, %s1054
      // Predicated region
      $region33: #{rc_block.1} parent=31 // pred_check
        %p1056 = pneg %p100
      $region34: #{rc_block.1} parent=31 // pred_check_branch
        %1058 = sbr.rel (%p1056) target = $region36
      $region35: #{rc_block.1} parent=31 // pred_region
        _
      $region36: #{rc_block.1} parent=31 // pred_fallthru
        _
    $region32: #{rc_block.1} parent=5 // pred_fallthru
      _
    %p1059 = scmp.le.s32.totalorder 2, %s9
    // Predicated region
    $region37: #{rc_block.1} parent=5 // pred_check
      %p1060 = pneg %p1059
    $region38: #{rc_block.1} parent=5 // pred_check_branch
      %1062 = sbr.rel (%p1060) target = $region40
    $region39: #{rc_block.1} parent=5 // pred_region
      %s1063 = ssub.s32 %s9, 2
      // Predicated region
      $region41: #{rc_block.1} parent=39 // pred_check
        %p1064 = pneg %p106
      $region42: #{rc_block.1} parent=39 // pred_check_branch
        %1066 = sbr.rel (%p1064) target = $region44
      $region43: #{rc_block.1} parent=39 // pred_region
        %p1067 = scmp.lt.s32.totalorder %s15, 1
        %s1068 = scalar_select %p1067, %s15, 1
        %s1069 = smul.addr %s1068, 2
        %s1070 = smul.addr %s1069, 8
        %s1071 = scalar_lea.vmem %s3, %s1070
      $region44: #{rc_block.1} parent=39 // pred_fallthru
        _
    $region40: #{rc_block.1} parent=5 // pred_fallthru
      _
  $region6: #{rc_block.1} parent=0 // loop_footer
    %s13 = sadd.s32 1, %s9
  $region7: #{rc_block.1} parent=0 // loop_footer_branch
    %8 = sbr.rel target = $region3
  $region8: #{rc_block.1} parent=0 // loop_exit
    _

// kernel: tile.8
$region0: #{tile.8}
  #allocation0 [shape = 's32[1]{0}', space=sflag, size = 0x4, scoped, tag = 'scoped memory for tile.8']
  %s0 = inlined_call_operand.vmem [shape: f32[8], index: 0, kind: input, shape index: {}]
  %s1 = inlined_call_operand.vmem [shape: f32[16,8], index: 1, kind: output, shape index: {}]
  // Predicated region
  $region2: #{tile.8} parent=0 // pred_check
    _
  $region3: #{tile.8} parent=0 // pred_check_branch
    %3 = sbr.rel (0) target = $region5
  $region4: #{tile.8} parent=0 // pred_region
    _
  $region5: #{tile.8} parent=0 // pred_fallthru
    _
  %v4 = vld [vmem:[%s0] ss:$0 sm:$0xff]
  %5 = vst [vmem:[%s1] sm:$0xff] %v4
  %s6 = scalar_lea.vmem %s1, 8
  %7 = vst [vmem:[%s6] sm:$0xff] %v4

// kernel: tile.9
$region0: #{tile.9}
  %s0 = inlined_call_operand.vmem [shape: f32[16,8], index: 0, kind: input, shape index: {}]
  %s1 = inlined_call_operand.vmem [shape: f32[1,128], index: 1, kind: output, shape index: {}]
  $region1: #{tile.9} parent=0
    #allocation0 [shape = 'u8[4096]{0}', space=vmem, size = 0x1000, scoped, tag = 'scoped mem for output reshape']
    %v2 = vld [vmem:[%s0] sm:$0x1]
    %vm3 = vcmask 64512
    %4 = vst.msk [vmem:[#allocation0] sm:$0x1] %vm3, %v2
    %s5 = scalar_lea.vmem %s0, 15
    %v6 = vld [vmem:[%s5] sm:$0x1]
    %7 = vrot.lane.b32.xlu0 %v6, 120
    %v8 = vpop.permute.xlu0 %7
    %vm9 = vcmask 1048512
    %10 = vst.msk [vmem:[#allocation0] sm:$0x1] %vm9, %v8
    %s11 = scalar_lea.vmem %s0, 14
    %v12 = vld [vmem:[%s11] sm:$0x1]
    %13 = vrot.lane.b32.xlu0 %v12, 112
    %v14 = vpop.permute.xlu0 %13
    %vm15 = vcmask 982912
    %16 = vst.msk [vmem:[#allocation0] sm:$0x1] %vm15, %v14
    %s17 = scalar_lea.vmem %s0, 13
    %v18 = vld [vmem:[%s17] sm:$0x1]
    %19 = vrot.lane.b32.xlu0 %v18, 104
    %v20 = vpop.permute.xlu0 %19
    %vm21 = vcmask 917312
    %22 = vst.msk [vmem:[#allocation0] sm:$0x1] %vm21, %v20
    %s23 = scalar_lea.vmem %s0, 12
    %v24 = vld [vmem:[%s23] sm:$0x1]
    %25 = vrot.lane.b32.xlu0 %v24, 96
    %v26 = vpop.permute.xlu0 %25
    %vm27 = vcmask 851712
    %28 = vst.msk [vmem:[#allocation0] sm:$0x1] %vm27, %v26
    %s29 = scalar_lea.vmem %s0, 11
    %v30 = vld [vmem:[%s29] sm:$0x1]
    %31 = vrot.lane.b32.xlu0 %v30, 88
    %v32 = vpop.permute.xlu0 %31
    %vm33 = vcmask 786112
    %34 = vst.msk [vmem:[#allocation0] sm:$0x1] %vm33, %v32
    %s35 = scalar_lea.vmem %s0, 10
    %v36 = vld [vmem:[%s35] sm:$0x1]
    %37 = vrot.lane.b32.xlu0 %v36, 80
    %v38 = vpop.permute.xlu0 %37
    %vm39 = vcmask 720512
    %40 = vst.msk [vmem:[#allocation0] sm:$0x1] %vm39, %v38
    %s41 = scalar_lea.vmem %s0, 9
    %v42 = vld [vmem:[%s41] sm:$0x1]
    %43 = vrot.lane.b32.xlu0 %v42, 72
    %v44 = vpop.permute.xlu0 %43
    %vm45 = vcmask 654912
    %46 = vst.msk [vmem:[#allocation0] sm:$0x1] %vm45, %v44
    %s47 = scalar_lea.vmem %s0, 8
    %v48 = vld [vmem:[%s47] sm:$0x1]
    %49 = vrot.lane.b32.xlu0 %v48, 64
    %v50 = vpop.permute.xlu0 %49
    %vm51 = vcmask 589312
    %52 = vst.msk [vmem:[#allocation0] sm:$0x1] %vm51, %v50
    %s53 = scalar_lea.vmem %s0, 7
    %v54 = vld [vmem:[%s53] sm:$0x1]
    %55 = vrot.lane.b32.xlu0 %v54, 56
    %v56 = vpop.permute.xlu0 %55
    %vm57 = vcmask 523712
    %58 = vst.msk [vmem:[#allocation0] sm:$0x1] %vm57, %v56
    %s59 = scalar_lea.vmem %s0, 6
    %v60 = vld [vmem:[%s59] sm:$0x1]
    %61 = vrot.lane.b32.xlu0 %v60, 48
    %v62 = vpop.permute.xlu0 %61
    %vm63 = vcmask 458112
    %64 = vst.msk [vmem:[#allocation0] sm:$0x1] %vm63, %v62
    %s65 = scalar_lea.vmem %s0, 5
    %v66 = vld [vmem:[%s65] sm:$0x1]
    %67 = vrot.lane.b32.xlu0 %v66, 40
    %v68 = vpop.permute.xlu0 %67
    %vm69 = vcmask 392512
    %70 = vst.msk [vmem:[#allocation0] sm:$0x1] %vm69, %v68
    %s71 = scalar_lea.vmem %s0, 4
    %v72 = vld [vmem:[%s71] sm:$0x1]
    %73 = vrot.lane.b32.xlu0 %v72, 32
    %v74 = vpop.permute.xlu0 %73
    %vm75 = vcmask 326912
    %76 = vst.msk [vmem:[#allocation0] sm:$0x1] %vm75, %v74
    %s77 = scalar_lea.vmem %s0, 3
    %v78 = vld [vmem:[%s77] sm:$0x1]
    %79 = vrot.lane.b32.xlu0 %v78, 24
    %v80 = vpop.permute.xlu0 %79
    %vm81 = vcmask 261312
    %82 = vst.msk [vmem:[#allocation0] sm:$0x1] %vm81, %v80
    %s83 = scalar_lea.vmem %s0, 2
    %v84 = vld [vmem:[%s83] sm:$0x1]
    %85 = vrot.lane.b32.xlu0 %v84, 16
    %v86 = vpop.permute.xlu0 %85
    %vm87 = vcmask 195712
    %88 = vst.msk [vmem:[#allocation0] sm:$0x1] %vm87, %v86
    %s89 = scalar_lea.vmem %s0, 1
    %v90 = vld [vmem:[%s89] sm:$0x1]
    %91 = vrot.lane.b32.xlu0 %v90, 8
    %v92 = vpop.permute.xlu0 %91
    %vm93 = vcmask 130112
    %94 = vst.msk [vmem:[#allocation0] sm:$0x1] %vm93, %v92
    %s96 = sshllo.u32 0, 1
    %v98 = vld [vmem:[#allocation0] sm:%s96]
    %s99 = sshllo.u32 0, 1
    %100 = vst [vmem:[%s1] sm:%s99] %v98

// kernel: rc_block.1
$region0: #{rc_block.1}
  #allocation0 [shape = 'u32[]', space=smem, size = 0x4, offset = 0x4, fixed_abs, tag = 'smem constant byte address 0x4 - core index']
  #allocation1 [shape = 'u32[144,128]{1,0:T(1,128)}', space=vmem, size = 0x12000, scoped, tag = 'internal scratch']
  #allocation2 [shape = 'f32[18,128]{1,0:T(8,128)}', space=vmem, size = 0x3000, scoped, tag = 'scratch operand']
  %s0 = inlined_call_operand.vmem [shape: f32[2,16,128], index: 0, kind: input, shape index: {}]
  %s1 = inlined_call_operand.vmem [shape: f32[3,128,128], index: 1, kind: input, shape index: {}]
  %s2 = inlined_call_operand.vmem [shape: f32[1,128], index: 2, kind: input, shape index: {}]
  %s3 = inlined_call_operand.vmem [shape: f32[2,16,128], index: 3, kind: output, shape index: {}]
  %s4 = sld [smem:[#allocation0]]
  $region45: #{rc_block.1} parent=0
    _
  %s6 = ssub.s32 1, %s4
  %s7 = scalar_select 0, %s6, %s4
  loop: start=0, step=1, limit=4
  $region2: #{rc_block.1} parent=0 // loop_pre_header
    _
  $region3: #{rc_block.1} parent=0 // loop_header
    %s9 = sphi 0, %s13
    %p10 = scmp.ge.s32.totalorder %s9, 4
    %s19 = sphi 0, %s21
    %s22 = sphi 0, %s19
    %s23 = sphi 0, %s22
    %s39 = sphi 0, %s23
    %s43 = sphi 0, %s43
    %s45 = sphi 0, %s43
    %s46 = sphi 0, %s45
    %s60 = sphi 0, %s46
    %s64 = sphi 0, %s64
    %s66 = sphi 0, %s64
    %s67 = sphi 0, %s66
    %s81 = sphi 0, %s67
    %s87 = sphi 0, %s89
    %s90 = sphi 0, %s87
    %s91 = sphi 0, %s90
    %s107 = sphi 0, %s91
  $region4: #{rc_block.1} parent=0 // loop_header_branch
    %12 = sbr.rel (%p10) target = $region8
  $region5: #{rc_block.1} parent=0 // loop_body
    %s14 = ssub.s32 %s9, 1
    %s15 = ssub.s32 %s9, 2
    %s16 = sadd.s32 %s9, 1
    %s17 = ssub.s32 %s9, %s16
    %p18 = scmp.eq.s32.totalorder %s17, 0
    %s20 = sadd.s32 %s19, 1
    %s21 = scalar_select %p18, %s19, %s20
    %p24 = pneg %p18
    %p25 = scmp.eq.s32.totalorder %s9, 1
    %p26 = por %p24, %p25
    %p27 = scmp.ne.s32.totalorder %s19, %s22
    %p28 = scmp.eq.s32.totalorder %s9, 0
    %p29 = por %p27, %p28
    %p30 = scmp.ne.s32.totalorder %s19, %s22
    %p31 = scmp.eq.s32.totalorder %s14, 1
    %p32 = por %p30, %p31
    %p33 = scmp.ne.s32.totalorder %s22, %s23
    %p34 = scmp.eq.s32.totalorder %s14, 0
    %p35 = por %p33, %p34
    %p36 = scmp.ne.s32.totalorder %s22, %s23
    %p37 = scmp.eq.s32.totalorder %s15, 1
    %p38 = por %p36, %p37
    %p40 = scmp.ne.s32.totalorder %s23, %s39
    %p41 = scmp.eq.s32.totalorder %s15, 0
    %p42 = por %p40, %p41
    %s44 = sadd.s32 %s43, 1
    %p47 = scmp.eq.s32.totalorder %s9, 1
    %p48 = scmp.ne.s32.totalorder %s43, %s45
    %p49 = scmp.eq.s32.totalorder %s9, 0
    %p50 = por %p48, %p49
    %p51 = scmp.ne.s32.totalorder %s43, %s45
    %p52 = scmp.eq.s32.totalorder %s14, 1
    %p53 = por %p51, %p52
    %p54 = scmp.ne.s32.totalorder %s45, %s46
    %p55 = scmp.eq.s32.totalorder %s14, 0
    %p56 = por %p54, %p55
    %p57 = scmp.ne.s32.totalorder %s45, %s46
    %p58 = scmp.eq.s32.totalorder %s15, 1
    %p59 = por %p57, %p58
    %p61 = scmp.ne.s32.totalorder %s46, %s60
    %p62 = scmp.eq.s32.totalorder %s15, 0
    %p63 = por %p61, %p62
    %s65 = sadd.s32 %s64, 1
    %p68 = scmp.eq.s32.totalorder %s9, 1
    %p69 = scmp.ne.s32.totalorder %s64, %s66
    %p70 = scmp.eq.s32.totalorder %s9, 0
    %p71 = por %p69, %p70
    %p72 = scmp.ne.s32.totalorder %s64, %s66
    %p73 = scmp.eq.s32.totalorder %s14, 1
    %p74 = por %p72, %p73
    %p75 = scmp.ne.s32.totalorder %s66, %s67
    %p76 = scmp.eq.s32.totalorder %s14, 0
    %p77 = por %p75, %p76
    %p78 = scmp.ne.s32.totalorder %s66, %s67
    %p79 = scmp.eq.s32.totalorder %s15, 1
    %p80 = por %p78, %p79
    %p82 = scmp.ne.s32.totalorder %s67, %s81
    %p83 = scmp.eq.s32.totalorder %s15, 0
    %p84 = por %p82, %p83
    %s85 = ssub.s32 %s9, %s16
    %p86 = scmp.eq.s32.totalorder %s85, 0
    %s88 = sadd.s32 %s87, 1
    %s89 = scalar_select %p86, %s87, %s88
    %p92 = pneg %p86
    %p93 = scmp.eq.s32.totalorder %s9, 1
    %p94 = por %p92, %p93
    %p95 = scmp.ne.s32.totalorder %s87, %s90
    %p96 = scmp.eq.s32.totalorder %s9, 0
    %p97 = por %p95, %p96
    %p98 = scmp.ne.s32.totalorder %s87, %s90
    %p99 = scmp.eq.s32.totalorder %s14, 1
    %p100 = por %p98, %p99
    %p101 = scmp.ne.s32.totalorder %s90, %s91
    %p102 = scmp.eq.s32.totalorder %s14, 0
    %p103 = por %p101, %p102
    %p104 = scmp.ne.s32.totalorder %s90, %s91
    %p105 = scmp.eq.s32.totalorder %s15, 1
    %p106 = por %p104, %p105
    %p108 = scmp.ne.s32.totalorder %s91, %s107
    %p109 = scmp.eq.s32.totalorder %s15, 0
    %p110 = por %p108, %p109
    %p111 = scmp.le.s32.totalorder 1, %s9
    %p112 = scmp.lt.s32.totalorder %s9, 3
    %p113 = pnand %p111, %p112
    %p114 = pneg %p113
    // Predicated region
    $region9: #{rc_block.1} parent=5 // pred_check
      _
    $region10: #{rc_block.1} parent=5 // pred_check_branch
      %116 = sbr.rel (%p113) target = $region12
    $region11: #{rc_block.1} parent=5 // pred_region
      %s117 = ssub.s32 %s9, 1
      // Predicated region
      $region13: #{rc_block.1} parent=11 // pred_check
        %p118 = pneg %p56
      $region14: #{rc_block.1} parent=11 // pred_check_branch
        %120 = sbr.rel (%p118) target = $region16
      $region15: #{rc_block.1} parent=11 // pred_region
        _
      $region16: #{rc_block.1} parent=11 // pred_fallthru
        _
      // Predicated region
      $region17: #{rc_block.1} parent=11 // pred_check
        %p121 = pneg %p77
      $region18: #{rc_block.1} parent=11 // pred_check_branch
        %123 = sbr.rel (%p121) target = $region20
      $region19: #{rc_block.1} parent=11 // pred_region
        _
      $region20: #{rc_block.1} parent=11 // pred_fallthru
        _
    $region12: #{rc_block.1} parent=5 // pred_fallthru
      _
    %p124 = scmp.lt.s32.totalorder %s9, 2
    // Predicated region
    $region21: #{rc_block.1} parent=5 // pred_check
      %p125 = pneg %p124
    $region22: #{rc_block.1} parent=5 // pred_check_branch
      %127 = sbr.rel (%p125) target = $region24
    $region23: #{rc_block.1} parent=5 // pred_region
      // Predicated region
      $region25: #{rc_block.1} parent=23 // pred_check
        %p128 = pneg %p29
      $region26: #{rc_block.1} parent=23 // pred_check_branch
        %130 = sbr.rel (%p128) target = $region28
      $region27: #{rc_block.1} parent=23 // pred_region
        %p131 = scmp.lt.s32.totalorder %s9, 1
        %s132 = scalar_select %p131, %s9, 1
        %s133 = smul.addr %s132, 2
        %s134 = smul.addr %s133, 8
        %s135 = scalar_lea.vmem %s0, %s134
      $region28: #{rc_block.1} parent=23 // pred_fallthru
        _
    $region24: #{rc_block.1} parent=5 // pred_fallthru
      _
    %p136 = scmp.le.s32.totalorder 1, %s9
    %p137 = scmp.lt.s32.totalorder %s9, 3
    %p138 = pnand %p136, %p137
    %p139 = pneg %p138
    // Predicated region
    $region29: #{rc_block.1} parent=5 // pred_check
      _
    $region30: #{rc_block.1} parent=5 // pred_check_branch
      %141 = sbr.rel (%p138) target = $region32
    $region31: #{rc_block.1} parent=5 // pred_region
      %s142 = ssub.s32 %s9, 1
      %p143 = scmp.lt.s32.totalorder %s14, 1
      %s144 = scalar_select %p143, %s14, 1
      %s145 = smul.addr %s144, 2
      %s146 = smul.addr %s145, 8
      %s147 = scalar_lea.vmem %s0, %s146
      %p148 = pneg %p35
      %p149 = pneg %p32
      %p150 = pneg %p56
      %p151 = pneg %p53
      %p152 = pneg %p77
      %p153 = pneg %p74
      %p154 = pneg %p103
      %p155 = pneg %p100
      %p156 = scmp.lt.s32.totalorder %s14, 1
      %s157 = scalar_select %p156, %s14, 1
      %s158 = smul.addr %s157, 2
      %s159 = smul.addr %s158, 8
      %s160 = scalar_lea.vmem %s3, %s159
      %p161 = scmp.lt.s32.totalorder %s14, 1
      %s162 = scalar_select %p161, %s14, 1
      %s163 = smul.addr %s162, 2
      %s164 = smul.addr %s163, 8
      %s165 = scalar_lea.vmem %s0, %s164
      %p166 = scmp.lt.s32.totalorder %s14, 1
      %s167 = scalar_select %p166, %s14, 1
      %s168 = smul.addr %s167, 2
      %s169 = smul.addr %s168, 8
      %s170 = scalar_lea.vmem %s3, %s169
      %171 = vst [vmem:[#allocation2] sm:$0x1] 0.0
      %172 = vst [vmem:[#allocation2 + $0x11] sm:$0x1] 0.0
      %v173 = vld [vmem:[%s2] sm:$0x1]
      %v175 = vlaneseq
      %v176 = vshrl.u32 %v175, 7
      %v177 = vsub.s32 0, %v176
      %v178 = vrot.slane %v173, %v177
      %v180 = vld [vmem:[%s165] sm:$0xff]
      %v181 = vld [vmem:[%s165 + $0x8] sm:$0xff]
      %182 = vst [vmem:[#allocation2 + $0x1] sm:$0xff] %v180
      %183 = vst [vmem:[#allocation2 + $0x9] sm:$0xff] %v181
      %v184 = vld [vmem:[#allocation2] sm:$0xff]
      %v185 = vld [vmem:[#allocation2 + $0x8] sm:$0xff]
      %v186 = vld [vmem:[%s1] sm:$0xff]
      %v187 = vld [vmem:[%s1 + $0x8] sm:$0xff]
      %v188 = vld [vmem:[%s1 + $0x10] sm:$0xff]
      %v189 = vld [vmem:[%s1 + $0x18] sm:$0xff]
      %v190 = vld [vmem:[%s1 + $0x20] sm:$0xff]
      %v191 = vld [vmem:[%s1 + $0x28] sm:$0xff]
      %v192 = vld [vmem:[%s1 + $0x30] sm:$0xff]
      %v193 = vld [vmem:[%s1 + $0x38] sm:$0xff]
      %v194 = vld [vmem:[%s1 + $0x40] sm:$0xff]
      %v195 = vld [vmem:[%s1 + $0x48] sm:$0xff]
      %v196 = vld [vmem:[%s1 + $0x50] sm:$0xff]
      %v197 = vld [vmem:[%s1 + $0x58] sm:$0xff]
      %v198 = vld [vmem:[%s1 + $0x60] sm:$0xff]
      %v199 = vld [vmem:[%s1 + $0x68] sm:$0xff]
      %v200 = vld [vmem:[%s1 + $0x70] sm:$0xff]
      %v201 = vld [vmem:[%s1 + $0x78] sm:$0xff]
      %v202 = vld [vmem:[#allocation2 + $0x1] sm:$0xff]
      %v203 = vld [vmem:[#allocation2 + $0x9] sm:$0xff]
      %s204 = scalar_lea.vmem %s1, 128
      %v205 = vld [vmem:[%s204] sm:$0xff]
      %v206 = vld [vmem:[%s204 + $0x8] sm:$0xff]
      %v207 = vld [vmem:[%s204 + $0x10] sm:$0xff]
      %v208 = vld [vmem:[%s204 + $0x18] sm:$0xff]
      %v209 = vld [vmem:[%s204 + $0x20] sm:$0xff]
      %v210 = vld [vmem:[%s204 + $0x28] sm:$0xff]
      %v211 = vld [vmem:[%s204 + $0x30] sm:$0xff]
      %v212 = vld [vmem:[%s204 + $0x38] sm:$0xff]
      %v213 = vld [vmem:[%s204 + $0x40] sm:$0xff]
      %v214 = vld [vmem:[%s204 + $0x48] sm:$0xff]
      %v215 = vld [vmem:[%s204 + $0x50] sm:$0xff]
      %v216 = vld [vmem:[%s204 + $0x58] sm:$0xff]
      %v217 = vld [vmem:[%s204 + $0x60] sm:$0xff]
      %v218 = vld [vmem:[%s204 + $0x68] sm:$0xff]
      %v219 = vld [vmem:[%s204 + $0x70] sm:$0xff]
      %v220 = vld [vmem:[%s204 + $0x78] sm:$0xff]
      %221 = vmatprep.subr.mxu0 0.0
      %222 = vmatpush1.msra.mxu0 %v205
      %223 = vmatprep.subr.mxu0 0.0
      %224 = vmatpush1.msra.mxu0 %v206
      %225 = vmatprep.subr.mxu0 0.0
      %226 = vmatpush1.msra.mxu0 %v207
      %227 = vmatprep.subr.mxu0 0.0
      %228 = vmatpush1.msra.mxu0 %v208
      %229 = vmatprep.subr.mxu0 0.0
      %230 = vmatpush1.msra.mxu0 %v209
      %231 = vmatprep.subr.mxu0 0.0
      %232 = vmatpush1.msra.mxu0 %v210
      %233 = vmatprep.subr.mxu0 0.0
      %234 = vmatpush1.msra.mxu0 %v211
      %235 = vmatprep.subr.mxu0 0.0
      %236 = vmatpush1.msra.mxu0 %v212
      %237 = vmatprep.subr.mxu0 0.0
      %238 = vmatpush1.msra.mxu0 %v213
      %239 = vmatprep.subr.mxu0 0.0
      %240 = vmatpush1.msra.mxu0 %v214
      %241 = vmatprep.subr.mxu0 0.0
      %242 = vmatpush1.msra.mxu0 %v215
      %243 = vmatprep.subr.mxu0 0.0
      %244 = vmatpush1.msra.mxu0 %v216
      %245 = vmatprep.subr.mxu0 0.0
      %246 = vmatpush1.msra.mxu0 %v217
      %247 = vmatprep.subr.mxu0 0.0
      %248 = vmatpush1.msra.mxu0 %v218
      %249 = vmatprep.subr.mxu0 0.0
      %250 = vmatpush1.msra.mxu0 %v219
      %251 = vmatprep.subr.mxu0 0.0
      %252 = vmatpush1.msra.mxu0 %v220
      %253 = vmatprep.subr.mxu0 0.0
      %254 = vmatpush1.msra.mxu0 0.0
      %255 = vmatprep.subr.mxu0 0.0
      %256 = vmatpush1.msra.mxu0 0.0
      %257 = vmatprep.subr.mxu0 0.0
      %258 = vmatpush1.msra.mxu0 0.0
      %259 = vmatprep.subr.mxu0 0.0
      %260 = vmatpush1.msra.mxu0 0.0
      %261 = vmatprep.subr.mxu0 0.0
      %262 = vmatpush1.msra.mxu0 0.0
      %263 = vmatprep.subr.mxu0 0.0
      %264 = vmatpush1.msra.mxu0 0.0
      %265 = vmatprep.subr.mxu0 0.0
      %266 = vmatpush1.msra.mxu0 0.0
      %267 = vmatprep.subr.mxu0 0.0
      %268 = vmatpush1.msra.mxu0 0.0
      %269 = vmatprep.subr.mxu0 0.0
      %270 = vmatpush1.msra.mxu0 0.0
      %271 = vmatprep.subr.mxu0 0.0
      %272 = vmatpush1.msra.mxu0 0.0
      %273 = vmatprep.subr.mxu0 0.0
      %274 = vmatpush1.msra.mxu0 0.0
      %275 = vmatprep.subr.mxu0 0.0
      %276 = vmatpush1.msra.mxu0 0.0
      %277 = vmatprep.subr.mxu0 0.0
      %278 = vmatpush1.msra.mxu0 0.0
      %279 = vmatprep.subr.mxu0 0.0
      %280 = vmatpush1.msra.mxu0 0.0
      %281 = vmatprep.subr.mxu0 0.0
      %282 = vmatpush1.msra.mxu0 0.0
      %283 = vmatprep.subr.mxu0 0.0
      %284 = vmatpush1.msra.mxu0 0.0
      %285 = vmatprep.mubr.f32.mxu0 0.0
      %286 = vmatmul.mubr.f32.gmra.mrb[0].mxu0 %v202
      %v287 = vpop.f32.mrb[0].mxu0
      %v288 = vadd.f32 0.0, %v287
      %v289 = vpop.f32.mrb[0].mxu0
      %290 = vmatprep.mubr.f32.mxu0 0.0
      %291 = vmatmul.mubr.f32.gmra.mrb[0].mxu0 %v203
      %v292 = vpop.f32.mrb[0].mxu0
      %v293 = vadd.f32 0.0, %v292
      %v294 = vpop.f32.mrb[0].mxu0
      %295 = vdwg.mxu0
      %296 = vmatprep.subr.mxu0 0.0
      %297 = vmatpush1.msra.mxu0 %v186
      %298 = vmatprep.subr.mxu0 0.0
      %299 = vmatpush1.msra.mxu0 %v187
      %300 = vmatprep.subr.mxu0 0.0
      %301 = vmatpush1.msra.mxu0 %v188
      %302 = vmatprep.subr.mxu0 0.0
      %303 = vmatpush1.msra.mxu0 %v189
      %304 = vmatprep.subr.mxu0 0.0
      %305 = vmatpush1.msra.mxu0 %v190
      %306 = vmatprep.subr.mxu0 0.0
      %307 = vmatpush1.msra.mxu0 %v191
      %308 = vmatprep.subr.mxu0 0.0
      %309 = vmatpush1.msra.mxu0 %v192
      %310 = vmatprep.subr.mxu0 0.0
      %311 = vmatpush1.msra.mxu0 %v193
      %312 = vmatprep.subr.mxu0 0.0
      %313 = vmatpush1.msra.mxu0 %v194
      %314 = vmatprep.subr.mxu0 0.0
      %315 = vmatpush1.msra.mxu0 %v195
      %316 = vmatprep.subr.mxu0 0.0
      %317 = vmatpush1.msra.mxu0 %v196
      %318 = vmatprep.subr.mxu0 0.0
      %319 = vmatpush1.msra.mxu0 %v197
      %320 = vmatprep.subr.mxu0 0.0
      %321 = vmatpush1.msra.mxu0 %v198
      %322 = vmatprep.subr.mxu0 0.0
      %323 = vmatpush1.msra.mxu0 %v199
      %324 = vmatprep.subr.mxu0 0.0
      %325 = vmatpush1.msra.mxu0 %v200
      %326 = vmatprep.subr.mxu0 0.0
      %327 = vmatpush1.msra.mxu0 %v201
      %328 = vmatprep.subr.mxu0 0.0
      %329 = vmatpush1.msra.mxu0 0.0
      %330 = vmatprep.subr.mxu0 0.0
      %331 = vmatpush1.msra.mxu0 0.0
      %332 = vmatprep.subr.mxu0 0.0
      %333 = vmatpush1.msra.mxu0 0.0
      %334 = vmatprep.subr.mxu0 0.0
      %335 = vmatpush1.msra.mxu0 0.0
      %336 = vmatprep.subr.mxu0 0.0
      %337 = vmatpush1.msra.mxu0 0.0
      %338 = vmatprep.subr.mxu0 0.0
      %339 = vmatpush1.msra.mxu0 0.0
      %340 = vmatprep.subr.mxu0 0.0
      %341 = vmatpush1.msra.mxu0 0.0
      %342 = vmatprep.subr.mxu0 0.0
      %343 = vmatpush1.msra.mxu0 0.0
      %344 = vmatprep.subr.mxu0 0.0
      %345 = vmatpush1.msra.mxu0 0.0
      %346 = vmatprep.subr.mxu0 0.0
      %347 = vmatpush1.msra.mxu0 0.0
      %348 = vmatprep.subr.mxu0 0.0
      %349 = vmatpush1.msra.mxu0 0.0
      %350 = vmatprep.subr.mxu0 0.0
      %351 = vmatpush1.msra.mxu0 0.0
      %352 = vmatprep.subr.mxu0 0.0
      %353 = vmatpush1.msra.mxu0 0.0
      %354 = vmatprep.subr.mxu0 0.0
      %355 = vmatpush1.msra.mxu0 0.0
      %356 = vmatprep.subr.mxu0 0.0
      %357 = vmatpush1.msra.mxu0 0.0
      %358 = vmatprep.subr.mxu0 0.0
      %359 = vmatpush1.msra.mxu0 0.0
      %360 = vmatprep.mubr.f32.mxu0 0.0
      %361 = vmatmul.mubr.f32.gmra.mrb[0].mxu0 %v184
      %v362 = vpop.f32.mrb[0].mxu0
      %v363 = vadd.f32 %v288, %v362
      %v364 = vpop.f32.mrb[0].mxu0
      %365 = vmatprep.mubr.f32.mxu0 0.0
      %366 = vmatmul.mubr.f32.gmra.mrb[0].mxu0 %v185
      %v367 = vpop.f32.mrb[0].mxu0
      %v368 = vadd.f32 %v293, %v367
      %v369 = vpop.f32.mrb[0].mxu0
      %370 = vdwg.mxu0
      %v371 = vld [vmem:[#allocation2 + $0x2] sm:$0xff]
      %v372 = vld [vmem:[#allocation2 + $0xa] sm:$0xff]
      %s373 = scalar_lea.vmem %s1, 256
      %v374 = vld [vmem:[%s373] sm:$0xff]
      %v375 = vld [vmem:[%s373 + $0x8] sm:$0xff]
      %v376 = vld [vmem:[%s373 + $0x10] sm:$0xff]
      %v377 = vld [vmem:[%s373 + $0x18] sm:$0xff]
      %v378 = vld [vmem:[%s373 + $0x20] sm:$0xff]
      %v379 = vld [vmem:[%s373 + $0x28] sm:$0xff]
      %v380 = vld [vmem:[%s373 + $0x30] sm:$0xff]
      %v381 = vld [vmem:[%s373 + $0x38] sm:$0xff]
      %v382 = vld [vmem:[%s373 + $0x40] sm:$0xff]
      %v383 = vld [vmem:[%s373 + $0x48] sm:$0xff]
      %v384 = vld [vmem:[%s373 + $0x50] sm:$0xff]
      %v385 = vld [vmem:[%s373 + $0x58] sm:$0xff]
      %v386 = vld [vmem:[%s373 + $0x60] sm:$0xff]
      %v387 = vld [vmem:[%s373 + $0x68] sm:$0xff]
      %v388 = vld [vmem:[%s373 + $0x70] sm:$0xff]
      %v389 = vld [vmem:[%s373 + $0x78] sm:$0xff]
      %390 = vmatprep.subr.mxu0 0.0
      %391 = vmatpush1.msra.mxu0 %v374
      %392 = vmatprep.subr.mxu0 0.0
      %393 = vmatpush1.msra.mxu0 %v375
      %394 = vmatprep.subr.mxu0 0.0
      %395 = vmatpush1.msra.mxu0 %v376
      %396 = vmatprep.subr.mxu0 0.0
      %397 = vmatpush1.msra.mxu0 %v377
      %398 = vmatprep.subr.mxu0 0.0
      %399 = vmatpush1.msra.mxu0 %v378
      %400 = vmatprep.subr.mxu0 0.0
      %401 = vmatpush1.msra.mxu0 %v379
      %402 = vmatprep.subr.mxu0 0.0
      %403 = vmatpush1.msra.mxu0 %v380
      %404 = vmatprep.subr.mxu0 0.0
      %405 = vmatpush1.msra.mxu0 %v381
      %406 = vmatprep.subr.mxu0 0.0
      %407 = vmatpush1.msra.mxu0 %v382
      %408 = vmatprep.subr.mxu0 0.0
      %409 = vmatpush1.msra.mxu0 %v383
      %410 = vmatprep.subr.mxu0 0.0
      %411 = vmatpush1.msra.mxu0 %v384
      %412 = vmatprep.subr.mxu0 0.0
      %413 = vmatpush1.msra.mxu0 %v385
      %414 = vmatprep.subr.mxu0 0.0
      %415 = vmatpush1.msra.mxu0 %v386
      %416 = vmatprep.subr.mxu0 0.0
      %417 = vmatpush1.msra.mxu0 %v387
      %418 = vmatprep.subr.mxu0 0.0
      %419 = vmatpush1.msra.mxu0 %v388
      %420 = vmatprep.subr.mxu0 0.0
      %421 = vmatpush1.msra.mxu0 %v389
      %422 = vmatprep.subr.mxu0 0.0
      %423 = vmatpush1.msra.mxu0 0.0
      %424 = vmatprep.subr.mxu0 0.0
      %425 = vmatpush1.msra.mxu0 0.0
      %426 = vmatprep.subr.mxu0 0.0
      %427 = vmatpush1.msra.mxu0 0.0
      %428 = vmatprep.subr.mxu0 0.0
      %429 = vmatpush1.msra.mxu0 0.0
      %430 = vmatprep.subr.mxu0 0.0
      %431 = vmatpush1.msra.mxu0 0.0
      %432 = vmatprep.subr.mxu0 0.0
      %433 = vmatpush1.msra.mxu0 0.0
      %434 = vmatprep.subr.mxu0 0.0
      %435 = vmatpush1.msra.mxu0 0.0
      %436 = vmatprep.subr.mxu0 0.0
      %437 = vmatpush1.msra.mxu0 0.0
      %438 = vmatprep.subr.mxu0 0.0
      %439 = vmatpush1.msra.mxu0 0.0
      %440 = vmatprep.subr.mxu0 0.0
      %441 = vmatpush1.msra.mxu0 0.0
      %442 = vmatprep.subr.mxu0 0.0
      %443 = vmatpush1.msra.mxu0 0.0
      %444 = vmatprep.subr.mxu0 0.0
      %445 = vmatpush1.msra.mxu0 0.0
      %446 = vmatprep.subr.mxu0 0.0
      %447 = vmatpush1.msra.mxu0 0.0
      %448 = vmatprep.subr.mxu0 0.0
      %449 = vmatpush1.msra.mxu0 0.0
      %450 = vmatprep.subr.mxu0 0.0
      %451 = vmatpush1.msra.mxu0 0.0
      %452 = vmatprep.subr.mxu0 0.0
      %453 = vmatpush1.msra.mxu0 0.0
      %454 = vmatprep.mubr.f32.mxu0 0.0
      %455 = vmatmul.mubr.f32.gmra.mrb[0].mxu0 %v371
      %v456 = vpop.f32.mrb[0].mxu0
      %v457 = vadd.f32 0.0, %v456
      %v458 = vpop.f32.mrb[0].mxu0
      %459 = vmatprep.mubr.f32.mxu0 0.0
      %460 = vmatmul.mubr.f32.gmra.mrb[0].mxu0 %v372
      %v461 = vpop.f32.mrb[0].mxu0
      %v462 = vadd.f32 0.0, %v461
      %v463 = vpop.f32.mrb[0].mxu0
      %464 = vdwg.mxu0
      %v465 = vadd.f32 %v363, %v457
      %v466 = vadd.f32 %v368, %v462
      %v467 = vadd.f32 %v465, %v178
      %v468 = vadd.f32 %v466, %v178
      %v469 = vmax.f32 %v467, 0.0
      %v470 = vmax.f32 %v468, 0.0
      %v471 = vadd.f32 %v180, %v469
      %v472 = vadd.f32 %v181, %v470
      %473 = vst [vmem:[#allocation2 + $0x1] sm:$0xff] %v471
      %474 = vst [vmem:[#allocation2 + $0x9] sm:$0xff] %v472
      %v475 = vld [vmem:[#allocation2] sm:$0xff]
      %v476 = vld [vmem:[#allocation2 + $0x8] sm:$0xff]
      %v477 = vld [vmem:[%s1] sm:$0xff]
      %v478 = vld [vmem:[%s1 + $0x8] sm:$0xff]
      %v479 = vld [vmem:[%s1 + $0x10] sm:$0xff]
      %v480 = vld [vmem:[%s1 + $0x18] sm:$0xff]
      %v481 = vld [vmem:[%s1 + $0x20] sm:$0xff]
      %v482 = vld [vmem:[%s1 + $0x28] sm:$0xff]
      %v483 = vld [vmem:[%s1 + $0x30] sm:$0xff]
      %v484 = vld [vmem:[%s1 + $0x38] sm:$0xff]
      %v485 = vld [vmem:[%s1 + $0x40] sm:$0xff]
      %v486 = vld [vmem:[%s1 + $0x48] sm:$0xff]
      %v487 = vld [vmem:[%s1 + $0x50] sm:$0xff]
      %v488 = vld [vmem:[%s1 + $0x58] sm:$0xff]
      %v489 = vld [vmem:[%s1 + $0x60] sm:$0xff]
      %v490 = vld [vmem:[%s1 + $0x68] sm:$0xff]
      %v491 = vld [vmem:[%s1 + $0x70] sm:$0xff]
      %v492 = vld [vmem:[%s1 + $0x78] sm:$0xff]
      %v493 = vld [vmem:[#allocation2 + $0x1] sm:$0xff]
      %v494 = vld [vmem:[#allocation2 + $0x9] sm:$0xff]
      %v495 = vld [vmem:[%s204] sm:$0xff]
      %v496 = vld [vmem:[%s204 + $0x8] sm:$0xff]
      %v497 = vld [vmem:[%s204 + $0x10] sm:$0xff]
      %v498 = vld [vmem:[%s204 + $0x18] sm:$0xff]
      %v499 = vld [vmem:[%s204 + $0x20] sm:$0xff]
      %v500 = vld [vmem:[%s204 + $0x28] sm:$0xff]
      %v501 = vld [vmem:[%s204 + $0x30] sm:$0xff]
      %v502 = vld [vmem:[%s204 + $0x38] sm:$0xff]
      %v503 = vld [vmem:[%s204 + $0x40] sm:$0xff]
      %v504 = vld [vmem:[%s204 + $0x48] sm:$0xff]
      %v505 = vld [vmem:[%s204 + $0x50] sm:$0xff]
      %v506 = vld [vmem:[%s204 + $0x58] sm:$0xff]
      %v507 = vld [vmem:[%s204 + $0x60] sm:$0xff]
      %v508 = vld [vmem:[%s204 + $0x68] sm:$0xff]
      %v509 = vld [vmem:[%s204 + $0x70] sm:$0xff]
      %v510 = vld [vmem:[%s204 + $0x78] sm:$0xff]
      %511 = vmatprep.subr.mxu0 0.0
      %512 = vmatpush1.msra.mxu0 %v495
      %513 = vmatprep.subr.mxu0 0.0
      %514 = vmatpush1.msra.mxu0 %v496
      %515 = vmatprep.subr.mxu0 0.0
      %516 = vmatpush1.msra.mxu0 %v497
      %517 = vmatprep.subr.mxu0 0.0
      %518 = vmatpush1.msra.mxu0 %v498
      %519 = vmatprep.subr.mxu0 0.0
      %520 = vmatpush1.msra.mxu0 %v499
      %521 = vmatprep.subr.mxu0 0.0
      %522 = vmatpush1.msra.mxu0 %v500
      %523 = vmatprep.subr.mxu0 0.0
      %524 = vmatpush1.msra.mxu0 %v501
      %525 = vmatprep.subr.mxu0 0.0
      %526 = vmatpush1.msra.mxu0 %v502
      %527 = vmatprep.subr.mxu0 0.0
      %528 = vmatpush1.msra.mxu0 %v503
      %529 = vmatprep.subr.mxu0 0.0
      %530 = vmatpush1.msra.mxu0 %v504
      %531 = vmatprep.subr.mxu0 0.0
      %532 = vmatpush1.msra.mxu0 %v505
      %533 = vmatprep.subr.mxu0 0.0
      %534 = vmatpush1.msra.mxu0 %v506
      %535 = vmatprep.subr.mxu0 0.0
      %536 = vmatpush1.msra.mxu0 %v507
      %537 = vmatprep.subr.mxu0 0.0
      %538 = vmatpush1.msra.mxu0 %v508
      %539 = vmatprep.subr.mxu0 0.0
      %540 = vmatpush1.msra.mxu0 %v509
      %541 = vmatprep.subr.mxu0 0.0
      %542 = vmatpush1.msra.mxu0 %v510
      %543 = vmatprep.subr.mxu0 0.0
      %544 = vmatpush1.msra.mxu0 0.0
      %545 = vmatprep.subr.mxu0 0.0
      %546 = vmatpush1.msra.mxu0 0.0
      %547 = vmatprep.subr.mxu0 0.0
      %548 = vmatpush1.msra.mxu0 0.0
      %549 = vmatprep.subr.mxu0 0.0
      %550 = vmatpush1.msra.mxu0 0.0
      %551 = vmatprep.subr.mxu0 0.0
      %552 = vmatpush1.msra.mxu0 0.0
      %553 = vmatprep.subr.mxu0 0.0
      %554 = vmatpush1.msra.mxu0 0.0
      %555 = vmatprep.subr.mxu0 0.0
      %556 = vmatpush1.msra.mxu0 0.0
      %557 = vmatprep.subr.mxu0 0.0
      %558 = vmatpush1.msra.mxu0 0.0
      %559 = vmatprep.subr.mxu0 0.0
      %560 = vmatpush1.msra.mxu0 0.0
      %561 = vmatprep.subr.mxu0 0.0
      %562 = vmatpush1.msra.mxu0 0.0
      %563 = vmatprep.subr.mxu0 0.0
      %564 = vmatpush1.msra.mxu0 0.0
      %565 = vmatprep.subr.mxu0 0.0
      %566 = vmatpush1.msra.mxu0 0.0
      %567 = vmatprep.subr.mxu0 0.0
      %568 = vmatpush1.msra.mxu0 0.0
      %569 = vmatprep.subr.mxu0 0.0
      %570 = vmatpush1.msra.mxu0 0.0
      %571 = vmatprep.subr.mxu0 0.0
      %572 = vmatpush1.msra.mxu0 0.0
      %573 = vmatprep.subr.mxu0 0.0
      %574 = vmatpush1.msra.mxu0 0.0
      %575 = vmatprep.mubr.f32.mxu0 0.0
      %576 = vmatmul.mubr.f32.gmra.mrb[0].mxu0 %v493
      %v577 = vpop.f32.mrb[0].mxu0
      %v578 = vadd.f32 0.0, %v577
      %v579 = vpop.f32.mrb[0].mxu0
      %580 = vmatprep.mubr.f32.mxu0 0.0
      %581 = vmatmul.mubr.f32.gmra.mrb[0].mxu0 %v494
      %v582 = vpop.f32.mrb[0].mxu0
      %v583 = vadd.f32 0.0, %v582
      %v584 = vpop.f32.mrb[0].mxu0
      %585 = vdwg.mxu0
      %586 = vmatprep.subr.mxu0 0.0
      %587 = vmatpush1.msra.mxu0 %v477
      %588 = vmatprep.subr.mxu0 0.0
      %589 = vmatpush1.msra.mxu0 %v478
      %590 = vmatprep.subr.mxu0 0.0
      %591 = vmatpush1.msra.mxu0 %v479
      %592 = vmatprep.subr.mxu0 0.0
      %593 = vmatpush1.msra.mxu0 %v480
      %594 = vmatprep.subr.mxu0 0.0
      %595 = vmatpush1.msra.mxu0 %v481
      %596 = vmatprep.subr.mxu0 0.0
      %597 = vmatpush1.msra.mxu0 %v482
      %598 = vmatprep.subr.mxu0 0.0
      %599 = vmatpush1.msra.mxu0 %v483
      %600 = vmatprep.subr.mxu0 0.0
      %601 = vmatpush1.msra.mxu0 %v484
      %602 = vmatprep.subr.mxu0 0.0
      %603 = vmatpush1.msra.mxu0 %v485
      %604 = vmatprep.subr.mxu0 0.0
      %605 = vmatpush1.msra.mxu0 %v486
      %606 = vmatprep.subr.mxu0 0.0
      %607 = vmatpush1.msra.mxu0 %v487
      %608 = vmatprep.subr.mxu0 0.0
      %609 = vmatpush1.msra.mxu0 %v488
      %610 = vmatprep.subr.mxu0 0.0
      %611 = vmatpush1.msra.mxu0 %v489
      %612 = vmatprep.subr.mxu0 0.0
      %613 = vmatpush1.msra.mxu0 %v490
      %614 = vmatprep.subr.mxu0 0.0
      %615 = vmatpush1.msra.mxu0 %v491
      %616 = vmatprep.subr.mxu0 0.0
      %617 = vmatpush1.msra.mxu0 %v492
      %618 = vmatprep.subr.mxu0 0.0
      %619 = vmatpush1.msra.mxu0 0.0
      %620 = vmatprep.subr.mxu0 0.0
      %621 = vmatpush1.msra.mxu0 0.0
      %622 = vmatprep.subr.mxu0 0.0
      %623 = vmatpush1.msra.mxu0 0.0
      %624 = vmatprep.subr.mxu0 0.0
      %625 = vmatpush1.msra.mxu0 0.0
      %626 = vmatprep.subr.mxu0 0.0
      %627 = vmatpush1.msra.mxu0 0.0
      %628 = vmatprep.subr.mxu0 0.0
      %629 = vmatpush1.msra.mxu0 0.0
      %630 = vmatprep.subr.mxu0 0.0
      %631 = vmatpush1.msra.mxu0 0.0
      %632 = vmatprep.subr.mxu0 0.0
      %633 = vmatpush1.msra.mxu0 0.0
      %634 = vmatprep.subr.mxu0 0.0
      %635 = vmatpush1.msra.mxu0 0.0
      %636 = vmatprep.subr.mxu0 0.0
      %637 = vmatpush1.msra.mxu0 0.0
      %638 = vmatprep.subr.mxu0 0.0
      %639 = vmatpush1.msra.mxu0 0.0
      %640 = vmatprep.subr.mxu0 0.0
      %641 = vmatpush1.msra.mxu0 0.0
      %642 = vmatprep.subr.mxu0 0.0
      %643 = vmatpush1.msra.mxu0 0.0
      %644 = vmatprep.subr.mxu0 0.0
      %645 = vmatpush1.msra.mxu0 0.0
      %646 = vmatprep.subr.mxu0 0.0
      %647 = vmatpush1.msra.mxu0 0.0
      %648 = vmatprep.subr.mxu0 0.0
      %649 = vmatpush1.msra.mxu0 0.0
      %650 = vmatprep.mubr.f32.mxu0 0.0
      %651 = vmatmul.mubr.f32.gmra.mrb[0].mxu0 %v475
      %v652 = vpop.f32.mrb[0].mxu0
      %v653 = vadd.f32 %v578, %v652
      %v654 = vpop.f32.mrb[0].mxu0
      %655 = vmatprep.mubr.f32.mxu0 0.0
      %656 = vmatmul.mubr.f32.gmra.mrb[0].mxu0 %v476
      %v657 = vpop.f32.mrb[0].mxu0
      %v658 = vadd.f32 %v583, %v657
      %v659 = vpop.f32.mrb[0].mxu0
      %660 = vdwg.mxu0
      %v661 = vld [vmem:[#allocation2 + $0x2] sm:$0xff]
      %v662 = vld [vmem:[#allocation2 + $0xa] sm:$0xff]
      %v663 = vld [vmem:[%s373] sm:$0xff]
      %v664 = vld [vmem:[%s373 + $0x8] sm:$0xff]
      %v665 = vld [vmem:[%s373 + $0x10] sm:$0xff]
      %v666 = vld [vmem:[%s373 + $0x18] sm:$0xff]
      %v667 = vld [vmem:[%s373 + $0x20] sm:$0xff]
      %v668 = vld [vmem:[%s373 + $0x28] sm:$0xff]
      %v669 = vld [vmem:[%s373 + $0x30] sm:$0xff]
      %v670 = vld [vmem:[%s373 + $0x38] sm:$0xff]
      %v671 = vld [vmem:[%s373 + $0x40] sm:$0xff]
      %v672 = vld [vmem:[%s373 + $0x48] sm:$0xff]
      %v673 = vld [vmem:[%s373 + $0x50] sm:$0xff]
      %v674 = vld [vmem:[%s373 + $0x58] sm:$0xff]
      %v675 = vld [vmem:[%s373 + $0x60] sm:$0xff]
      %v676 = vld [vmem:[%s373 + $0x68] sm:$0xff]
      %v677 = vld [vmem:[%s373 + $0x70] sm:$0xff]
      %v678 = vld [vmem:[%s373 + $0x78] sm:$0xff]
      %679 = vmatprep.subr.mxu0 0.0
      %680 = vmatpush1.msra.mxu0 %v663
      %681 = vmatprep.subr.mxu0 0.0
      %682 = vmatpush1.msra.mxu0 %v664
      %683 = vmatprep.subr.mxu0 0.0
      %684 = vmatpush1.msra.mxu0 %v665
      %685 = vmatprep.subr.mxu0 0.0
      %686 = vmatpush1.msra.mxu0 %v666
      %687 = vmatprep.subr.mxu0 0.0
      %688 = vmatpush1.msra.mxu0 %v667
      %689 = vmatprep.subr.mxu0 0.0
      %690 = vmatpush1.msra.mxu0 %v668
      %691 = vmatprep.subr.mxu0 0.0
      %692 = vmatpush1.msra.mxu0 %v669
      %693 = vmatprep.subr.mxu0 0.0
      %694 = vmatpush1.msra.mxu0 %v670
      %695 = vmatprep.subr.mxu0 0.0
      %696 = vmatpush1.msra.mxu0 %v671
      %697 = vmatprep.subr.mxu0 0.0
      %698 = vmatpush1.msra.mxu0 %v672
      %699 = vmatprep.subr.mxu0 0.0
      %700 = vmatpush1.msra.mxu0 %v673
      %701 = vmatprep.subr.mxu0 0.0
      %702 = vmatpush1.msra.mxu0 %v674
      %703 = vmatprep.subr.mxu0 0.0
      %704 = vmatpush1.msra.mxu0 %v675
      %705 = vmatprep.subr.mxu0 0.0
      %706 = vmatpush1.msra.mxu0 %v676
      %707 = vmatprep.subr.mxu0 0.0
      %708 = vmatpush1.msra.mxu0 %v677
      %709 = vmatprep.subr.mxu0 0.0
      %710 = vmatpush1.msra.mxu0 %v678
      %711 = vmatprep.subr.mxu0 0.0
      %712 = vmatpush1.msra.mxu0 0.0
      %713 = vmatprep.subr.mxu0 0.0
      %714 = vmatpush1.msra.mxu0 0.0
      %715 = vmatprep.subr.mxu0 0.0
      %716 = vmatpush1.msra.mxu0 0.0
      %717 = vmatprep.subr.mxu0 0.0
      %718 = vmatpush1.msra.mxu0 0.0
      %719 = vmatprep.subr.mxu0 0.0
      %720 = vmatpush1.msra.mxu0 0.0
      %721 = vmatprep.subr.mxu0 0.0
      %722 = vmatpush1.msra.mxu0 0.0
      %723 = vmatprep.subr.mxu0 0.0
      %724 = vmatpush1.msra.mxu0 0.0
      %725 = vmatprep.subr.mxu0 0.0
      %726 = vmatpush1.msra.mxu0 0.0
      %727 = vmatprep.subr.mxu0 0.0
      %728 = vmatpush1.msra.mxu0 0.0
      %729 = vmatprep.subr.mxu0 0.0
      %730 = vmatpush1.msra.mxu0 0.0
      %731 = vmatprep.subr.mxu0 0.0
      %732 = vmatpush1.msra.mxu0 0.0
      %733 = vmatprep.subr.mxu0 0.0
      %734 = vmatpush1.msra.mxu0 0.0
      %735 = vmatprep.subr.mxu0 0.0
      %736 = vmatpush1.msra.mxu0 0.0
      %737 = vmatprep.subr.mxu0 0.0
      %738 = vmatpush1.msra.mxu0 0.0
      %739 = vmatprep.subr.mxu0 0.0
      %740 = vmatpush1.msra.mxu0 0.0
      %741 = vmatprep.subr.mxu0 0.0
      %742 = vmatpush1.msra.mxu0 0.0
      %743 = vmatprep.mubr.f32.mxu0 0.0
      %744 = vmatmul.mubr.f32.gmra.mrb[0].mxu0 %v661
      %v745 = vpop.f32.mrb[0].mxu0
      %v746 = vadd.f32 0.0, %v745
      %v747 = vpop.f32.mrb[0].mxu0
      %748 = vmatprep.mubr.f32.mxu0 0.0
      %749 = vmatmul.mubr.f32.gmra.mrb[0].mxu0 %v662
      %v750 = vpop.f32.mrb[0].mxu0
      %v751 = vadd.f32 0.0, %v750
      %v752 = vpop.f32.mrb[0].mxu0
      %753 = vdwg.mxu0
      %v754 = vadd.f32 %v653, %v746
      %v755 = vadd.f32 %v658, %v751
      %v756 = vadd.f32 %v754, %v178
      %v757 = vadd.f32 %v755, %v178
      %v758 = vmax.f32 %v756, 0.0
      %v759 = vmax.f32 %v757, 0.0
      %v760 = vadd.f32 %v180, %v758
      %v761 = vadd.f32 %v181, %v759
      %762 = vst [vmem:[#allocation2 + $0x1] sm:$0xff] %v760
      %763 = vst [vmem:[#allocation2 + $0x9] sm:$0xff] %v761
      %v764 = vld [vmem:[#allocation2] sm:$0xff]
      %v765 = vld [vmem:[#allocation2 + $0x8] sm:$0xff]
      %v766 = vld [vmem:[%s1] sm:$0xff]
      %v767 = vld [vmem:[%s1 + $0x8] sm:$0xff]
      %v768 = vld [vmem:[%s1 + $0x10] sm:$0xff]
      %v769 = vld [vmem:[%s1 + $0x18] sm:$0xff]
      %v770 = vld [vmem:[%s1 + $0x20] sm:$0xff]
      %v771 = vld [vmem:[%s1 + $0x28] sm:$0xff]
      %v772 = vld [vmem:[%s1 + $0x30] sm:$0xff]
      %v773 = vld [vmem:[%s1 + $0x38] sm:$0xff]
      %v774 = vld [vmem:[%s1 + $0x40] sm:$0xff]
      %v775 = vld [vmem:[%s1 + $0x48] sm:$0xff]
      %v776 = vld [vmem:[%s1 + $0x50] sm:$0xff]
      %v777 = vld [vmem:[%s1 + $0x58] sm:$0xff]
      %v778 = vld [vmem:[%s1 + $0x60] sm:$0xff]
      %v779 = vld [vmem:[%s1 + $0x68] sm:$0xff]
      %v780 = vld [vmem:[%s1 + $0x70] sm:$0xff]
      %v781 = vld [vmem:[%s1 + $0x78] sm:$0xff]
      %v782 = vld [vmem:[#allocation2 + $0x1] sm:$0xff]
      %v783 = vld [vmem:[#allocation2 + $0x9] sm:$0xff]
      %v784 = vld [vmem:[%s204] sm:$0xff]
      %v785 = vld [vmem:[%s204 + $0x8] sm:$0xff]
      %v786 = vld [vmem:[%s204 + $0x10] sm:$0xff]
      %v787 = vld [vmem:[%s204 + $0x18] sm:$0xff]
      %v788 = vld [vmem:[%s204 + $0x20] sm:$0xff]
      %v789 = vld [vmem:[%s204 + $0x28] sm:$0xff]
      %v790 = vld [vmem:[%s204 + $0x30] sm:$0xff]
      %v791 = vld [vmem:[%s204 + $0x38] sm:$0xff]
      %v792 = vld [vmem:[%s204 + $0x40] sm:$0xff]
      %v793 = vld [vmem:[%s204 + $0x48] sm:$0xff]
      %v794 = vld [vmem:[%s204 + $0x50] sm:$0xff]
      %v795 = vld [vmem:[%s204 + $0x58] sm:$0xff]
      %v796 = vld [vmem:[%s204 + $0x60] sm:$0xff]
      %v797 = vld [vmem:[%s204 + $0x68] sm:$0xff]
      %v798 = vld [vmem:[%s204 + $0x70] sm:$0xff]
      %v799 = vld [vmem:[%s204 + $0x78] sm:$0xff]
      %800 = vmatprep.subr.mxu0 0.0
      %801 = vmatpush1.msra.mxu0 %v784
      %802 = vmatprep.subr.mxu0 0.0
      %803 = vmatpush1.msra.mxu0 %v785
      %804 = vmatprep.subr.mxu0 0.0
      %805 = vmatpush1.msra.mxu0 %v786
      %806 = vmatprep.subr.mxu0 0.0
      %807 = vmatpush1.msra.mxu0 %v787
      %808 = vmatprep.subr.mxu0 0.0
      %809 = vmatpush1.msra.mxu0 %v788
      %810 = vmatprep.subr.mxu0 0.0
      %811 = vmatpush1.msra.mxu0 %v789
      %812 = vmatprep.subr.mxu0 0.0
      %813 = vmatpush1.msra.mxu0 %v790
      %814 = vmatprep.subr.mxu0 0.0
      %815 = vmatpush1.msra.mxu0 %v791
      %816 = vmatprep.subr.mxu0 0.0
      %817 = vmatpush1.msra.mxu0 %v792
      %818 = vmatprep.subr.mxu0 0.0
      %819 = vmatpush1.msra.mxu0 %v793
      %820 = vmatprep.subr.mxu0 0.0
      %821 = vmatpush1.msra.mxu0 %v794
      %822 = vmatprep.subr.mxu0 0.0
      %823 = vmatpush1.msra.mxu0 %v795
      %824 = vmatprep.subr.mxu0 0.0
      %825 = vmatpush1.msra.mxu0 %v796
      %826 = vmatprep.subr.mxu0 0.0
      %827 = vmatpush1.msra.mxu0 %v797
      %828 = vmatprep.subr.mxu0 0.0
      %829 = vmatpush1.msra.mxu0 %v798
      %830 = vmatprep.subr.mxu0 0.0
      %831 = vmatpush1.msra.mxu0 %v799
      %832 = vmatprep.subr.mxu0 0.0
      %833 = vmatpush1.msra.mxu0 0.0
      %834 = vmatprep.subr.mxu0 0.0
      %835 = vmatpush1.msra.mxu0 0.0
      %836 = vmatprep.subr.mxu0 0.0
      %837 = vmatpush1.msra.mxu0 0.0
      %838 = vmatprep.subr.mxu0 0.0
      %839 = vmatpush1.msra.mxu0 0.0
      %840 = vmatprep.subr.mxu0 0.0
      %841 = vmatpush1.msra.mxu0 0.0
      %842 = vmatprep.subr.mxu0 0.0
      %843 = vmatpush1.msra.mxu0 0.0
      %844 = vmatprep.subr.mxu0 0.0
      %845 = vmatpush1.msra.mxu0 0.0
      %846 = vmatprep.subr.mxu0 0.0
      %847 = vmatpush1.msra.mxu0 0.0
      %848 = vmatprep.subr.mxu0 0.0
      %849 = vmatpush1.msra.mxu0 0.0
      %850 = vmatprep.subr.mxu0 0.0
      %851 = vmatpush1.msra.mxu0 0.0
      %852 = vmatprep.subr.mxu0 0.0
      %853 = vmatpush1.msra.mxu0 0.0
      %854 = vmatprep.subr.mxu0 0.0
      %855 = vmatpush1.msra.mxu0 0.0
      %856 = vmatprep.subr.mxu0 0.0
      %857 = vmatpush1.msra.mxu0 0.0
      %858 = vmatprep.subr.mxu0 0.0
      %859 = vmatpush1.msra.mxu0 0.0
      %860 = vmatprep.subr.mxu0 0.0
      %861 = vmatpush1.msra.mxu0 0.0
      %862 = vmatprep.subr.mxu0 0.0
      %863 = vmatpush1.msra.mxu0 0.0
      %864 = vmatprep.mubr.f32.mxu0 0.0
      %865 = vmatmul.mubr.f32.gmra.mrb[0].mxu0 %v782
      %v866 = vpop.f32.mrb[0].mxu0
      %v867 = vadd.f32 0.0, %v866
      %v868 = vpop.f32.mrb[0].mxu0
      %869 = vmatprep.mubr.f32.mxu0 0.0
      %870 = vmatmul.mubr.f32.gmra.mrb[0].mxu0 %v783
      %v871 = vpop.f32.mrb[0].mxu0
      %v872 = vadd.f32 0.0, %v871
      %v873 = vpop.f32.mrb[0].mxu0
      %874 = vdwg.mxu0
      %875 = vmatprep.subr.mxu0 0.0
      %876 = vmatpush1.msra.mxu0 %v766
      %877 = vmatprep.subr.mxu0 0.0
      %878 = vmatpush1.msra.mxu0 %v767
      %879 = vmatprep.subr.mxu0 0.0
      %880 = vmatpush1.msra.mxu0 %v768
      %881 = vmatprep.subr.mxu0 0.0
      %882 = vmatpush1.msra.mxu0 %v769
      %883 = vmatprep.subr.mxu0 0.0
      %884 = vmatpush1.msra.mxu0 %v770
      %885 = vmatprep.subr.mxu0 0.0
      %886 = vmatpush1.msra.mxu0 %v771
      %887 = vmatprep.subr.mxu0 0.0
      %888 = vmatpush1.msra.mxu0 %v772
      %889 = vmatprep.subr.mxu0 0.0
      %890 = vmatpush1.msra.mxu0 %v773
      %891 = vmatprep.subr.mxu0 0.0
      %892 = vmatpush1.msra.mxu0 %v774
      %893 = vmatprep.subr.mxu0 0.0
      %894 = vmatpush1.msra.mxu0 %v775
      %895 = vmatprep.subr.mxu0 0.0
      %896 = vmatpush1.msra.mxu0 %v776
      %897 = vmatprep.subr.mxu0 0.0
      %898 = vmatpush1.msra.mxu0 %v777
      %899 = vmatprep.subr.mxu0 0.0
      %900 = vmatpush1.msra.mxu0 %v778
      %901 = vmatprep.subr.mxu0 0.0
      %902 = vmatpush1.msra.mxu0 %v779
      %903 = vmatprep.subr.mxu0 0.0
      %904 = vmatpush1.msra.mxu0 %v780
      %905 = vmatprep.subr.mxu0 0.0
      %906 = vmatpush1.msra.mxu0 %v781
      %907 = vmatprep.subr.mxu0 0.0
      %908 = vmatpush1.msra.mxu0 0.0
      %909 = vmatprep.subr.mxu0 0.0
      %910 = vmatpush1.msra.mxu0 0.0
      %911 = vmatprep.subr.mxu0 0.0
      %912 = vmatpush1.msra.mxu0 0.0
      %913 = vmatprep.subr.mxu0 0.0
      %914 = vmatpush1.msra.mxu0 0.0
      %915 = vmatprep.subr.mxu0 0.0
      %916 = vmatpush1.msra.mxu0 0.0
      %917 = vmatprep.subr.mxu0 0.0
      %918 = vmatpush1.msra.mxu0 0.0
      %919 = vmatprep.subr.mxu0 0.0
      %920 = vmatpush1.msra.mxu0 0.0
      %921 = vmatprep.subr.mxu0 0.0
      %922 = vmatpush1.msra.mxu0 0.0
      %923 = vmatprep.subr.mxu0 0.0
      %924 = vmatpush1.msra.mxu0 0.0
      %925 = vmatprep.subr.mxu0 0.0
      %926 = vmatpush1.msra.mxu0 0.0
      %927 = vmatprep.subr.mxu0 0.0
      %928 = vmatpush1.msra.mxu0 0.0
      %929 = vmatprep.subr.mxu0 0.0
      %930 = vmatpush1.msra.mxu0 0.0
      %931 = vmatprep.subr.mxu0 0.0
      %932 = vmatpush1.msra.mxu0 0.0
      %933 = vmatprep.subr.mxu0 0.0
      %934 = vmatpush1.msra.mxu0 0.0
      %935 = vmatprep.subr.mxu0 0.0
      %936 = vmatpush1.msra.mxu0 0.0
      %937 = vmatprep.subr.mxu0 0.0
      %938 = vmatpush1.msra.mxu0 0.0
      %939 = vmatprep.mubr.f32.mxu0 0.0
      %940 = vmatmul.mubr.f32.gmra.mrb[0].mxu0 %v764
      %v941 = vpop.f32.mrb[0].mxu0
      %v942 = vadd.f32 %v867, %v941
      %v943 = vpop.f32.mrb[0].mxu0
      %944 = vmatprep.mubr.f32.mxu0 0.0
      %945 = vmatmul.mubr.f32.gmra.mrb[0].mxu0 %v765
      %v946 = vpop.f32.mrb[0].mxu0
      %v947 = vadd.f32 %v872, %v946
      %v948 = vpop.f32.mrb[0].mxu0
      %949 = vdwg.mxu0
      %v950 = vld [vmem:[#allocation2 + $0x2] sm:$0xff]
      %v951 = vld [vmem:[#allocation2 + $0xa] sm:$0xff]
      %v952 = vld [vmem:[%s373] sm:$0xff]
      %v953 = vld [vmem:[%s373 + $0x8] sm:$0xff]
      %v954 = vld [vmem:[%s373 + $0x10] sm:$0xff]
      %v955 = vld [vmem:[%s373 + $0x18] sm:$0xff]
      %v956 = vld [vmem:[%s373 + $0x20] sm:$0xff]
      %v957 = vld [vmem:[%s373 + $0x28] sm:$0xff]
      %v958 = vld [vmem:[%s373 + $0x30] sm:$0xff]
      %v959 = vld [vmem:[%s373 + $0x38] sm:$0xff]
      %v960 = vld [vmem:[%s373 + $0x40] sm:$0xff]
      %v961 = vld [vmem:[%s373 + $0x48] sm:$0xff]
      %v962 = vld [vmem:[%s373 + $0x50] sm:$0xff]
      %v963 = vld [vmem:[%s373 + $0x58] sm:$0xff]
      %v964 = vld [vmem:[%s373 + $0x60] sm:$0xff]
      %v965 = vld [vmem:[%s373 + $0x68] sm:$0xff]
      %v966 = vld [vmem:[%s373 + $0x70] sm:$0xff]
      %v967 = vld [vmem:[%s373 + $0x78] sm:$0xff]
      %968 = vmatprep.subr.mxu0 0.0
      %969 = vmatpush1.msra.mxu0 %v952
      %970 = vmatprep.subr.mxu0 0.0
      %971 = vmatpush1.msra.mxu0 %v953
      %972 = vmatprep.subr.mxu0 0.0
      %973 = vmatpush1.msra.mxu0 %v954
      %974 = vmatprep.subr.mxu0 0.0
      %975 = vmatpush1.msra.mxu0 %v955
      %976 = vmatprep.subr.mxu0 0.0
      %977 = vmatpush1.msra.mxu0 %v956
      %978 = vmatprep.subr.mxu0 0.0
      %979 = vmatpush1.msra.mxu0 %v957
      %980 = vmatprep.subr.mxu0 0.0
      %981 = vmatpush1.msra.mxu0 %v958
      %982 = vmatprep.subr.mxu0 0.0
      %983 = vmatpush1.msra.mxu0 %v959
      %984 = vmatprep.subr.mxu0 0.0
      %985 = vmatpush1.msra.mxu0 %v960
      %986 = vmatprep.subr.mxu0 0.0
      %987 = vmatpush1.msra.mxu0 %v961
      %988 = vmatprep.subr.mxu0 0.0
      %989 = vmatpush1.msra.mxu0 %v962
      %990 = vmatprep.subr.mxu0 0.0
      %991 = vmatpush1.msra.mxu0 %v963
      %992 = vmatprep.subr.mxu0 0.0
      %993 = vmatpush1.msra.mxu0 %v964
      %994 = vmatprep.subr.mxu0 0.0
      %995 = vmatpush1.msra.mxu0 %v965
      %996 = vmatprep.subr.mxu0 0.0
      %997 = vmatpush1.msra.mxu0 %v966
      %998 = vmatprep.subr.mxu0 0.0
      %999 = vmatpush1.msra.mxu0 %v967
      %1000 = vmatprep.subr.mxu0 0.0
      %1001 = vmatpush1.msra.mxu0 0.0
      %1002 = vmatprep.subr.mxu0 0.0
      %1003 = vmatpush1.msra.mxu0 0.0
      %1004 = vmatprep.subr.mxu0 0.0
      %1005 = vmatpush1.msra.mxu0 0.0
      %1006 = vmatprep.subr.mxu0 0.0
      %1007 = vmatpush1.msra.mxu0 0.0
      %1008 = vmatprep.subr.mxu0 0.0
      %1009 = vmatpush1.msra.mxu0 0.0
      %1010 = vmatprep.subr.mxu0 0.0
      %1011 = vmatpush1.msra.mxu0 0.0
      %1012 = vmatprep.subr.mxu0 0.0
      %1013 = vmatpush1.msra.mxu0 0.0
      %1014 = vmatprep.subr.mxu0 0.0
      %1015 = vmatpush1.msra.mxu0 0.0
      %1016 = vmatprep.subr.mxu0 0.0
      %1017 = vmatpush1.msra.mxu0 0.0
      %1018 = vmatprep.subr.mxu0 0.0
      %1019 = vmatpush1.msra.mxu0 0.0
      %1020 = vmatprep.subr.mxu0 0.0
      %1021 = vmatpush1.msra.mxu0 0.0
      %1022 = vmatprep.subr.mxu0 0.0
      %1023 = vmatpush1.msra.mxu0 0.0
      %1024 = vmatprep.subr.mxu0 0.0
      %1025 = vmatpush1.msra.mxu0 0.0
      %1026 = vmatprep.subr.mxu0 0.0
      %1027 = vmatpush1.msra.mxu0 0.0
      %1028 = vmatprep.subr.mxu0 0.0
      %1029 = vmatpush1.msra.mxu0 0.0
      %1030 = vmatprep.subr.mxu0 0.0
      %1031 = vmatpush1.msra.mxu0 0.0
      %1032 = vmatprep.mubr.f32.mxu0 0.0
      %1033 = vmatmul.mubr.f32.gmra.mrb[0].mxu0 %v950
      %v1034 = vpop.f32.mrb[0].mxu0
      %v1035 = vadd.f32 0.0, %v1034
      %v1036 = vpop.f32.mrb[0].mxu0
      %1037 = vmatprep.mubr.f32.mxu0 0.0
      %1038 = vmatmul.mubr.f32.gmra.mrb[0].mxu0 %v951
      %v1039 = vpop.f32.mrb[0].mxu0
      %v1040 = vadd.f32 0.0, %v1039
      %v1041 = vpop.f32.mrb[0].mxu0
      %1042 = vdwg.mxu0
      %v1043 = vadd.f32 %v942, %v1035
      %v1044 = vadd.f32 %v947, %v1040
      %v1045 = vadd.f32 %v1043, %v178
      %v1046 = vadd.f32 %v1044, %v178
      %v1047 = vmax.f32 %v1045, 0.0
      %v1048 = vmax.f32 %v1046, 0.0
      %1049 = vst [vmem:[%s170] sm:$0xff] %v1047
      %1050 = vst [vmem:[%s170 + $0x8] sm:$0xff] %v1048
      %p1051 = scmp.lt.s32.totalorder %s14, 1
      %s1052 = scalar_select %p1051, %s14, 1
      %s1053 = smul.addr %s1052, 2
      %s1054 = smul.addr %s1053, 8
      %s1055 = scalar_lea.vmem %s3, %s1054
      // Predicated region
      $region33: #{rc_block.1} parent=31 // pred_check
        %p1056 = pneg %p100
      $region34: #{rc_block.1} parent=31 // pred_check_branch
        %1058 = sbr.rel (%p1056) target = $region36
      $region35: #{rc_block.1} parent=31 // pred_region
        _
      $region36: #{rc_block.1} parent=31 // pred_fallthru
        _
    $region32: #{rc_block.1} parent=5 // pred_fallthru
      _
    %p1059 = scmp.le.s32.totalorder 2, %s9
    // Predicated region
    $region37: #{rc_block.1} parent=5 // pred_check
      %p1060 = pneg %p1059
    $region38: #{rc_block.1} parent=5 // pred_check_branch
      %1062 = sbr.rel (%p1060) target = $region40
    $region39: #{rc_block.1} parent=5 // pred_region
      %s1063 = ssub.s32 %s9, 2
      // Predicated region
      $region41: #{rc_block.1} parent=39 // pred_check
        %p1064 = pneg %p106
      $region42: #{rc_block.1} parent=39 // pred_check_branch
        %1066 = sbr.rel (%p1064) target = $region44
      $region43: #{rc_block.1} parent=39 // pred_region
        %p1067 = scmp.lt.s32.totalorder %s15, 1
        %s1068 = scalar_select %p1067, %s15, 1
        %s1069 = smul.addr %s1068, 2
        %s1070 = smul.addr %s1069, 8
        %s1071 = scalar_lea.vmem %s3, %s1070
      $region44: #{rc_block.1} parent=39 // pred_fallthru
        _
    $region40: #{rc_block.1} parent=5 // pred_fallthru
      _
  $region6: #{rc_block.1} parent=0 // loop_footer
    %s13 = sadd.s32 1, %s9
  $region7: #{rc_block.1} parent=0 // loop_footer_branch
    %8 = sbr.rel target = $region3
  $region8: #{rc_block.1} parent=0 // loop_exit
    _

</llo_original>
